<compile_context>
chip_gen: v7x
topology: tpu7x:2x2x1
jax: 0.10.0
libtpu: 0.0.40
codegen_flags: <defaults>
</compile_context>

<pallas_src>
import functools
import math

import jax
import jax.numpy as jnp
import numpy as np
from jax.experimental import pallas as pl
from jax.experimental.pallas import tpu as pltpu


# ----------------------------- fused layer kernel -----------------------------

def _sgt_layer_kernel(*refs, nheads, head_dim, seq_len, bt, with_pred):
    if with_pred:
        (h_ref, wqkv, bqkv, wo, bo, g1, be1, w1, b1, w2, b2, g2, be2,
         wp, bp, out_ref, logits_ref) = refs
    else:
        (h_ref, wqkv, bqkv, wo, bo, g1, be1, w1, b1, w2, b2, g2, be2,
         out_ref) = refs
        wp = bp = logits_ref = None

    H, hd, L = nheads, head_dim, seq_len
    D = H * hd
    Lh = L // H          # rows of the per-sequence slab owned by one head
    G = D // L           # column chunks of width L forming one k_t row group
    N = bt * L           # rows in this grid step

    x_in = h_ref[...]
    x_bf = x_in.astype(jnp.bfloat16)                 # matmul operand
    x = x_in.astype(jnp.float32)                     # residual (f32 math)

    def mm(a_bf, w_ref, b_ref):
        # MXU-friendly: bf16 operands, f32 accumulation, f32 bias add.
        return (jnp.dot(a_bf, w_ref[...],
                        preferred_element_type=jnp.float32) + b_ref[...])

    # ---- fused QKV projection (Wq pre-scaled by 1/sqrt(hd); Wq/Wk columns
    #      pre-permuted host-side so the .view() head splits become static
    #      contiguous slices / stacks below).
    qkv = mm(x_bf, wqkv, bqkv)                       # [N, 3D] f32
    # bf16 attention operands; batch axis = sequences in this block (L%8==0
    # keeps these leading-split reshapes tile-aligned).
    q3 = qkv[:, 0 * D:1 * D].astype(jnp.bfloat16).reshape(bt, L, D)
    k3 = qkv[:, 1 * D:2 * D].astype(jnp.bfloat16).reshape(bt, L, D)
    v3 = qkv[:, 2 * D:3 * D].astype(jnp.bfloat16).reshape(bt, L, D)

    # ---- per-head operands with the module's exact legacy .view() semantics.
    # NOTE: the Lh-row head slices are not 8-aligned in general; this is a
    # register-level relayout, not masked memory traffic.
    q_heads, k_heads, v_heads = [], [], []
    for a in range(H):
        r0 = a * Lh
        qh = q3[:, r0:r0 + Lh, :]                    # [bt, Lh, D]
        kh = k3[:, r0:r0 + Lh, :]                    # [bt, Lh, D]
        vh = v3[:, r0:r0 + Lh, :]                    # [bt, Lh, D]
        q_heads.append(qh)
        # k_.view(B,H,hd,L): stack the G column slabs of kh along the
        # contraction axis -> one [*, hd] x [hd, L] dot per (head, slot).
        k_heads.append(jnp.concatenate(
            [kh[:, :, g * L:(g + 1) * L] for g in range(G)], axis=1))   # [bt, hd, L]
        # v_.view(B,H,L,hd) (score columns are host-permuted to (e,t) order):
        v_heads.append(jnp.concatenate(
            [vh[:, :, e * hd:(e + 1) * hd] for e in range(H)], axis=1))  # [bt, L, hd]

    # ---- scores, legacy softmax over the HEAD dimension, context ----
    ctx = [[None] * H for _ in range(H)]             # ctx[head][slot]: [bt,Lh,hd]
    for s in range(H):
        sc = [jnp.einsum("bik,bkj->bij",
                         q_heads[a][:, :, s * hd:(s + 1) * hd], k_heads[a],
                         preferred_element_type=jnp.float32)
              for a in range(H)]                     # each [bt, Lh, L]
        m = sc[0]
        for a in range(1, H):
            m = jnp.maximum(m, sc[a])
        ex = [jnp.exp(sc[a] - m) for a in range(H)]
        den = ex[0]
        for a in range(1, H):
            den = den + ex[a]
        inv = pl.reciprocal(den, approx=True)
        for a in range(H):
            p = (ex[a] * inv).astype(jnp.bfloat16)
            ctx[a][s] = jnp.einsum("bik,bkj->bij", p, v_heads[a],
                                   preferred_element_type=jnp.float32)

    # context.view(B, -1, D): lane-dense in-register assembly (no scratch).
    h_sa3 = jnp.concatenate(
        [jnp.concatenate(ctx[a], axis=-1) for a in range(H)], axis=1)    # [bt, L, D]
    h_sa_bf = h_sa3.reshape(N, D).astype(jnp.bfloat16)

    h_sa = mm(h_sa_bf, wo, bo)                       # linear_final, [N, D] f32
    # nn.Dropout / dropout1 / dropout2 / fdropout: identity at inference.

    def layer_norm(y, g_ref, b_ref):
        mu = jnp.mean(y, axis=-1, keepdims=True)
        yc = y - mu
        var = jnp.mean(yc * yc, axis=-1, keepdims=True)
        return yc * jax.lax.rsqrt(var + 1e-5) * g_ref[...] + b_ref[...]

    h1 = layer_norm(h_sa + x, g1, be1)
    ff = jnp.maximum(mm(h1.astype(jnp.bfloat16), w1, b1), 0.0)   # ReLU(FFN1)
    ff = mm(ff.astype(jnp.bfloat16), w2, b2)                     # FFN2
    h2 = layer_norm(ff + h1, g2, be2)
    out_ref[...] = h2.astype(out_ref.dtype)

    if with_pred:
        # Fused Prediction + ReLU (last layer only); weight padded to 128 lanes
        # host-side so this store is lane-dense.
        logits_ref[...] = jnp.maximum(
            mm(h2.astype(jnp.bfloat16), wp, bp), 0.0).astype(logits_ref.dtype)


# ------------------------ block / dtype / VMEM heuristics ------------------------

def _vmem_capacity_bytes():
    try:
        return int(pltpu.get_tpu_info().vmem_capacity_bytes)
    except Exception:
        return 64 * 1024 * 1024      # conservative (v7x-sized) fallback


def _choose_block_and_dtype(B, L, D, c_pad, vmem_bytes):
    """Pick per-step batch block bt and inter-layer activation dtype.

    Preference: (a) >=2 grid steps so a 2-TensorCore chip (v7x) can shard the
    'parallel' axis and the pipeline overlaps; (b) bf16 inter-layer activations
    (halved HBM traffic) which need block rows % 16 == 0; (c) the largest block
    that fits a conservative VMEM budget derived from the real capacity.
    """
    per_row = 48 * D + 8 * c_pad                     # f32 intermediates dominate
    budget = max(vmem_bytes // 3, 4 * 1024 * 1024)
    divs = [d for d in range(1, B + 1) if B % d == 0 and d * L * per_row <= budget]
    if not divs:
        divs = [1]
    for want_multi, want_bf16 in ((True, True), (True, False),
                                  (False, True), (False, False)):
        cand = [d for d in divs
                if (not want_multi or B // d >= 2)
                and (not want_bf16 or (d * L) % 16 == 0)]
        if cand:
            return max(cand), (jnp.bfloat16 if want_bf16 else jnp.float32)
    return 1, jnp.float32


# ----------------------------- per-layer pallas_call -----------------------------

def sgt_layer(h_flat, layer_w, *, nheads, seq_len, bt, act_dtype,
              pred_params=None, vmem_limit=48 * 1024 * 1024):
    NL, D = h_flat.shape
    L = seq_len
    B = NL // L
    nb = B // bt
    hd = D // nheads
    with_pred = pred_params is not None
    weights = tuple(layer_w) + (tuple(pred_params) if with_pred else ())

    row_block = bt * L
    h_spec = pl.BlockSpec((row_block, D), lambda i: (i, 0))
    # TODO(synk): grid-invariant weights could be single-buffered
    # (pipeline_mode=pl.Buffered(1)) to free VMEM on v7x.
    w_specs = [pl.BlockSpec(w.shape, lambda i: (0, 0)) for w in weights]

    out_h = jax.ShapeDtypeStruct((NL, D), act_dtype)
    out_h_spec = pl.BlockSpec((row_block, D), lambda i: (i, 0))
    if with_pred:
        Cp = pred_params[0].shape[1]
        out_shape = (out_h, jax.ShapeDtypeStruct((NL, Cp), jnp.float32))
        out_specs = (out_h_spec, pl.BlockSpec((row_block, Cp), lambda i: (i, 0)))
    else:
        out_shape = out_h
        out_specs = out_h_spec

    kernel = functools.partial(_sgt_layer_kernel, nheads=nheads, head_dim=hd,
                               seq_len=L, bt=bt, with_pred=with_pred)
    return pl.pallas_call(
        kernel,
        out_shape=out_shape,
        grid=(nb,),
        in_specs=[h_spec] + w_specs,
        out_specs=out_specs,
        compiler_params=pltpu.CompilerParams(
            dimension_semantics=("parallel",),
            vmem_limit_bytes=int(vmem_limit)),
    )(h_flat, *weights)


# ------------------- host-side weight prep (done once, plain JAX) -------------------

def _head_view_permutations(D, L, H):
    """Column permutations folding the torch .view() head splits into Wq / Wk."""
    hd = D // H
    Lh = L // H
    G = D // L
    idx_q = np.empty((D,), np.int32)
    for s in range(H):
        for g in range(G):
            for u in range(Lh):
                idx_q[s * hd + g * Lh + u] = s * hd + u * G + g
    idx_k = np.empty((D,), np.int32)
    for g in range(G):
        for t in range(H):
            for r in range(Lh):
                idx_k[g * L + t * Lh + r] = g * L + r * H + t
    assert sorted(idx_q.tolist()) == list(range(D))
    assert sorted(idx_k.tolist()) == list(range(D))
    return idx_q, idx_k


def _prep_layer(layer_raw, nheads, seq_len, dtype=jnp.bfloat16):
    (wq, bq, wk, bk, wv, bv, wo, bo, g1, be1, w1, bf1, w2, bf2, g2, be2) = layer_raw
    D = wq.shape[1]
    hd = D // nheads
    L = seq_len
    # TODO(synk): configs with L % nheads != 0, D % L != 0 or L % 8 != 0 need a
    # slower row-wise .view() emulation / unaligned-reshape path; not
    # implemented in this fast kernel.
    assert D % nheads == 0 and L % nheads == 0 and D % L == 0 and L % 8 == 0
    idx_q, idx_k = _head_view_permutations(D, L, nheads)
    scale = 1.0 / math.sqrt(hd)
    wq_p = (wq * scale)[:, idx_q]
    bq_p = (bq * scale)[:, idx_q]
    wk_p = wk[:, idx_k]
    bk_p = bk[:, idx_k]
    wqkv = jnp.concatenate([wq_p, wk_p, wv], axis=1).astype(dtype)
    bqkv = jnp.concatenate([bq_p, bk_p, bv], axis=1).astype(jnp.float32)
    return (wqkv, bqkv, wo.astype(dtype), bo.astype(jnp.float32),
            g1.astype(jnp.float32), be1.astype(jnp.float32),
            w1.astype(dtype), bf1.astype(jnp.float32),
            w2.astype(dtype), bf2.astype(jnp.float32),
            g2.astype(jnp.float32), be2.astype(jnp.float32))


# ----------------------- parameter init & full forward (glue) -----------------------

def _linear_init(key, fan_in, fan_out):
    k1, k2 = jax.random.split(key)
    bound = 1.0 / math.sqrt(fan_in)
    w = jax.random.uniform(k1, (fan_in, fan_out), jnp.float32, -bound, bound)
    b = jax.random.uniform(k2, (1, fan_out), jnp.float32, -bound, bound)
    return w, b


def init_sgt_params(key, input_dims, emb_dim, num_layers, num_class):
    keys = jax.random.split(key, len(input_dims) + num_layers + 1)
    fc = [_linear_init(keys[i], d, emb_dim) for i, d in enumerate(input_dims)]
    layers = []
    for li in range(num_layers):
        lk = jax.random.split(keys[len(input_dims) + li], 6)
        wq, bq = _linear_init(lk[0], emb_dim, emb_dim)
        wk, bk = _linear_init(lk[1], emb_dim, emb_dim)
        wv, bv = _linear_init(lk[2], emb_dim, emb_dim)
        wo, bo = _linear_init(lk[3], emb_dim, emb_dim)
        w1, bf1 = _linear_init(lk[4], emb_dim, emb_dim)
        w2, bf2 = _linear_init(lk[5], emb_dim, emb_dim)
        g1 = jnp.ones((1, emb_dim), jnp.float32)
        be1 = jnp.zeros((1, emb_dim), jnp.float32)
        g2 = jnp.ones((1, emb_dim), jnp.float32)
        be2 = jnp.zeros((1, emb_dim), jnp.float32)
        layers.append((wq, bq, wk, bk, wv, bv, wo, bo, g1, be1,
                       w1, bf1, w2, bf2, g2, be2))
    pred_w, pred_b = _linear_init(keys[-1], emb_dim, num_class)
    return {"fc": fc, "layers": layers, "pred_w": pred_w, "pred_b": pred_b}


def sgt_forward(params, features_list, seqs, nheads, usemean=False):
    # Per-node-type embedding + concat + seqs gather: parameter/indexing glue.
    h_parts = [f @ w + b for f, (w, b) in zip(features_list, params["fc"])]
    h_nodes = jnp.concatenate(h_parts, axis=0)                # [N_total, D]
    h = h_nodes[seqs]                                         # [B, L, D]
    B, L, D = h.shape
    C = params["pred_w"].shape[1]
    Cp = ((C + 127) // 128) * 128                             # lane-dense logits

    vmem_cap = _vmem_capacity_bytes()
    bt, act_dtype = _choose_block_and_dtype(B, L, D, Cp, vmem_cap)
    vmem_limit = max(min(vmem_cap * 3 // 4, 100 * 1024 * 1024), 32 * 1024 * 1024)

    h_flat = h.reshape(B * L, D).astype(act_dtype)            # flat lane-dense rows

    layers = [_prep_layer(lp, nheads, L) for lp in params["layers"]]
    assert len(layers) >= 1
    wp = jnp.zeros((D, Cp), jnp.float32).at[:, :C].set(params["pred_w"])
    bp = jnp.zeros((1, Cp), jnp.float32).at[:, :C].set(params["pred_b"])
    pred = (wp.astype(jnp.bfloat16), bp)

    logits_flat = None
    for li, lw in enumerate(layers):
        if li == len(layers) - 1:
            h_flat, logits_flat = sgt_layer(h_flat, lw, nheads=nheads, seq_len=L,
                                            bt=bt, act_dtype=act_dtype,
                                            pred_params=pred,
                                            vmem_limit=vmem_limit)
        else:
            h_flat = sgt_layer(h_flat, lw, nheads=nheads, seq_len=L, bt=bt,
                               act_dtype=act_dtype, vmem_limit=vmem_limit)

    logits = logits_flat[:, :C].reshape(B, L, C)
    return logits.mean(axis=1) if usemean else logits[:, 0, :]


def sgt_forward_ref(params, features_list, seqs, nheads, usemean=False):
    """Pure-JAX f32 reference mirroring the PyTorch forward exactly."""
    h_parts = [f @ w + b for f, (w, b) in zip(features_list, params["fc"])]
    h = jnp.concatenate(h_parts, axis=0)[seqs]
    B, L, D = h.shape
    hd = D // nheads

    def ln(x, g, b):
        mu = x.mean(-1, keepdims=True)
        var = ((x - mu) ** 2).mean(-1, keepdims=True)
        return (x - mu) / jnp.sqrt(var + 1e-5) * g + b

    for (wq, bq, wk, bk, wv, bv, wo, bo, g1, be1,
         w1, bf1, w2, bf2, g2, be2) in params["layers"]:
        q = h @ wq + bq
        k = h @ wk + bk
        v = h @ wv + bv
        q_ = q.reshape(B, nheads, L, hd)
        k_t = k.reshape(B, nheads, hd, L)      # torch .view, NOT a transpose
        v_ = v.reshape(B, nheads, L, hd)
        s = jnp.einsum("bhij,bhjk->bhik", q_, k_t) / math.sqrt(hd)
        s = jax.nn.softmax(s, axis=1)          # legacy implicit softmax dim for 4-D
        ctx = jnp.einsum("bhik,bhkd->bhid", s, v_)
        h_sa = ctx.reshape(B, L, D) @ wo + bo
        h1 = ln(h_sa + h, g1, be1)
        hf = jax.nn.relu(h1 @ w1 + bf1) @ w2 + bf2
        h = ln(hf + h1, g2, be2)
    logits = jax.nn.relu(h @ params["pred_w"] + params["pred_b"])
    return logits.mean(axis=1) if usemean else logits[:, 0, :]


if __name__ == "__main__":
    key = jax.random.PRNGKey(0)
    # Two node-type feature matrices; `seqs` indexes rows of the concatenated
    # embedded node table.
    input_dims = [12, 20]
    node_counts = [5, 7]
    emb_dim, num_layers, nheads, num_class = 32, 2, 2, 4
    B, L = 2, 8

    k_feat, k_seq, k_par = jax.random.split(key, 3)
    feat_keys = jax.random.split(k_feat, len(input_dims))
    features_list = [jax.random.normal(fk, (n, d), jnp.float32)
                     for fk, n, d in zip(feat_keys, node_counts, input_dims)]
    total_nodes = sum(node_counts)
    seqs = jax.random.randint(k_seq, (B, L), 0, total_nodes, dtype=jnp.int32)

    params = init_sgt_params(k_par, input_dims, emb_dim, num_layers, num_class)

    out = sgt_forward(params, features_list, seqs, nheads, usemean=False)
    out = jax.block_until_ready(out)

    ref = sgt_forward_ref(params, features_list, seqs, nheads, usemean=False)
    assert out.shape == (B, num_class)
    # Tolerance reflects bf16 matmul/attention operands (f32 accumulation)
    # vs the pure-f32 reference.
    assert jnp.allclose(out, ref, rtol=4e-2, atol=4e-2)
    print("KERNEL_OK")
</pallas_src>

<mosaic_0001>
module attributes {stable_mosaic.version = 11 : i64} {
  func.func @_sgt_layer_kernel(%arg0: i32, %arg1: memref<8x32xf32, #tpu.memory_space<vmem>>, %arg2: memref<32x96xbf16, #tpu.memory_space<vmem>>, %arg3: memref<1x96xf32, #tpu.memory_space<vmem>>, %arg4: memref<32x32xbf16, #tpu.memory_space<vmem>>, %arg5: memref<1x32xf32, #tpu.memory_space<vmem>>, %arg6: memref<1x32xf32, #tpu.memory_space<vmem>>, %arg7: memref<1x32xf32, #tpu.memory_space<vmem>>, %arg8: memref<32x32xbf16, #tpu.memory_space<vmem>>, %arg9: memref<1x32xf32, #tpu.memory_space<vmem>>, %arg10: memref<32x32xbf16, #tpu.memory_space<vmem>>, %arg11: memref<1x32xf32, #tpu.memory_space<vmem>>, %arg12: memref<1x32xf32, #tpu.memory_space<vmem>>, %arg13: memref<1x32xf32, #tpu.memory_space<vmem>>, %arg14: memref<8x32xf32, #tpu.memory_space<vmem>>) attributes {dimension_semantics = [#tpu.dimension_semantics<parallel>], iteration_bounds = array<i64: 2>, scalar_prefetch = 0 : i64, scratch_operands = 0 : i64, tpu.core_type = #tpu.core_type<tc>, window_params = [{transform_indices = @transform_0, window_bounds = array<i64: 8, 32>}, {pipeline_mode = #tpu.pipeline_mode<synchronous>, transform_indices = @transform_1, window_bounds = array<i64: 32, 96>}, {pipeline_mode = #tpu.pipeline_mode<synchronous>, transform_indices = @transform_2, window_bounds = array<i64: 1, 96>}, {pipeline_mode = #tpu.pipeline_mode<synchronous>, transform_indices = @transform_3, window_bounds = array<i64: 32, 32>}, {pipeline_mode = #tpu.pipeline_mode<synchronous>, transform_indices = @transform_4, window_bounds = array<i64: 1, 32>}, {pipeline_mode = #tpu.pipeline_mode<synchronous>, transform_indices = @transform_5, window_bounds = array<i64: 1, 32>}, {pipeline_mode = #tpu.pipeline_mode<synchronous>, transform_indices = @transform_6, window_bounds = array<i64: 1, 32>}, {pipeline_mode = #tpu.pipeline_mode<synchronous>, transform_indices = @transform_7, window_bounds = array<i64: 32, 32>}, {pipeline_mode = #tpu.pipeline_mode<synchronous>, transform_indices = @transform_8, window_bounds = array<i64: 1, 32>}, {pipeline_mode = #tpu.pipeline_mode<synchronous>, transform_indices = @transform_9, window_bounds = array<i64: 32, 32>}, {pipeline_mode = #tpu.pipeline_mode<synchronous>, transform_indices = @transform_10, window_bounds = array<i64: 1, 32>}, {pipeline_mode = #tpu.pipeline_mode<synchronous>, transform_indices = @transform_11, window_bounds = array<i64: 1, 32>}, {pipeline_mode = #tpu.pipeline_mode<synchronous>, transform_indices = @transform_12, window_bounds = array<i64: 1, 32>}, {transform_indices = @transform_13, window_bounds = array<i64: 8, 32>}]} {
    %c0 = arith.constant 0 : index
    %c0_0 = arith.constant 0 : index
    %0 = vector.load %arg1[%c0, %c0_0] : memref<8x32xf32, #tpu.memory_space<vmem>>, vector<8x32xf32>
    %1 = arith.truncf %0 : vector<8x32xf32> to vector<8x32xbf16>
    %c0_1 = arith.constant 0 : index
    %c0_2 = arith.constant 0 : index
    %2 = vector.load %arg2[%c0_1, %c0_2] : memref<32x96xbf16, #tpu.memory_space<vmem>>, vector<32x96xbf16>
    %cst = arith.constant dense<0.000000e+00> : vector<8x96xf32>
    %3 = tpu.matmul %1, %2, %cst {dimension_numbers = #tpu.dot_dimension_numbers<[1], [0], [0], [1], [0, 0, 1, 1], [], []>} : vector<8x32xbf16>, vector<32x96xbf16>, vector<8x96xf32> -> vector<8x96xf32>
    %c0_3 = arith.constant 0 : index
    %c0_4 = arith.constant 0 : index
    %4 = vector.load %arg3[%c0_3, %c0_4] : memref<1x96xf32, #tpu.memory_space<vmem>>, vector<1x96xf32>
    %5 = vector.broadcast %4 : vector<1x96xf32> to vector<8x96xf32>
    %6 = arith.addf %3, %5 : vector<8x96xf32>
    %7 = vector.extract_strided_slice %6 {offsets = [0, 0], sizes = [8, 32], strides = [1, 1]} : vector<8x96xf32> to vector<8x32xf32>
    %8 = arith.truncf %7 : vector<8x32xf32> to vector<8x32xbf16>
    %9 = vector.shape_cast %8 : vector<8x32xbf16> to vector<1x8x32xbf16>
    %10 = vector.extract_strided_slice %6 {offsets = [0, 32], sizes = [8, 32], strides = [1, 1]} : vector<8x96xf32> to vector<8x32xf32>
    %11 = arith.truncf %10 : vector<8x32xf32> to vector<8x32xbf16>
    %12 = vector.shape_cast %11 : vector<8x32xbf16> to vector<1x8x32xbf16>
    %13 = vector.extract_strided_slice %6 {offsets = [0, 64], sizes = [8, 32], strides = [1, 1]} : vector<8x96xf32> to vector<8x32xf32>
    %14 = arith.truncf %13 : vector<8x32xf32> to vector<8x32xbf16>
    %15 = vector.shape_cast %14 : vector<8x32xbf16> to vector<1x8x32xbf16>
    %16 = vector.extract_strided_slice %9 {offsets = [0, 0, 0], sizes = [1, 4, 32], strides = [1, 1, 1]} : vector<1x8x32xbf16> to vector<1x4x32xbf16>
    %17 = vector.extract_strided_slice %12 {offsets = [0, 0, 0], sizes = [1, 4, 32], strides = [1, 1, 1]} : vector<1x8x32xbf16> to vector<1x4x32xbf16>
    %18 = vector.extract_strided_slice %15 {offsets = [0, 0, 0], sizes = [1, 4, 32], strides = [1, 1, 1]} : vector<1x8x32xbf16> to vector<1x4x32xbf16>
    %19 = vector.extract_strided_slice %17 {offsets = [0, 0, 0], sizes = [1, 4, 8], strides = [1, 1, 1]} : vector<1x4x32xbf16> to vector<1x4x8xbf16>
    %20 = vector.extract_strided_slice %17 {offsets = [0, 0, 8], sizes = [1, 4, 8], strides = [1, 1, 1]} : vector<1x4x32xbf16> to vector<1x4x8xbf16>
    %21 = vector.extract_strided_slice %17 {offsets = [0, 0, 16], sizes = [1, 4, 8], strides = [1, 1, 1]} : vector<1x4x32xbf16> to vector<1x4x8xbf16>
    %22 = vector.extract_strided_slice %17 {offsets = [0, 0, 24], sizes = [1, 4, 8], strides = [1, 1, 1]} : vector<1x4x32xbf16> to vector<1x4x8xbf16>
    %23 = tpu.concatenate %19, %20, %21, %22 in 1 : vector<1x4x8xbf16>, vector<1x4x8xbf16>, vector<1x4x8xbf16>, vector<1x4x8xbf16> -> vector<1x16x8xbf16>
    %24 = vector.extract_strided_slice %18 {offsets = [0, 0, 0], sizes = [1, 4, 16], strides = [1, 1, 1]} : vector<1x4x32xbf16> to vector<1x4x16xbf16>
    %25 = vector.extract_strided_slice %18 {offsets = [0, 0, 16], sizes = [1, 4, 16], strides = [1, 1, 1]} : vector<1x4x32xbf16> to vector<1x4x16xbf16>
    %26 = tpu.concatenate %24, %25 in 1 : vector<1x4x16xbf16>, vector<1x4x16xbf16> -> vector<1x8x16xbf16>
    %27 = vector.extract_strided_slice %9 {offsets = [0, 4, 0], sizes = [1, 4, 32], strides = [1, 1, 1]} : vector<1x8x32xbf16> to vector<1x4x32xbf16>
    %28 = vector.extract_strided_slice %12 {offsets = [0, 4, 0], sizes = [1, 4, 32], strides = [1, 1, 1]} : vector<1x8x32xbf16> to vector<1x4x32xbf16>
    %29 = vector.extract_strided_slice %15 {offsets = [0, 4, 0], sizes = [1, 4, 32], strides = [1, 1, 1]} : vector<1x8x32xbf16> to vector<1x4x32xbf16>
    %30 = vector.extract_strided_slice %28 {offsets = [0, 0, 0], sizes = [1, 4, 8], strides = [1, 1, 1]} : vector<1x4x32xbf16> to vector<1x4x8xbf16>
    %31 = vector.extract_strided_slice %28 {offsets = [0, 0, 8], sizes = [1, 4, 8], strides = [1, 1, 1]} : vector<1x4x32xbf16> to vector<1x4x8xbf16>
    %32 = vector.extract_strided_slice %28 {offsets = [0, 0, 16], sizes = [1, 4, 8], strides = [1, 1, 1]} : vector<1x4x32xbf16> to vector<1x4x8xbf16>
    %33 = vector.extract_strided_slice %28 {offsets = [0, 0, 24], sizes = [1, 4, 8], strides = [1, 1, 1]} : vector<1x4x32xbf16> to vector<1x4x8xbf16>
    %34 = tpu.concatenate %30, %31, %32, %33 in 1 : vector<1x4x8xbf16>, vector<1x4x8xbf16>, vector<1x4x8xbf16>, vector<1x4x8xbf16> -> vector<1x16x8xbf16>
    %35 = vector.extract_strided_slice %29 {offsets = [0, 0, 0], sizes = [1, 4, 16], strides = [1, 1, 1]} : vector<1x4x32xbf16> to vector<1x4x16xbf16>
    %36 = vector.extract_strided_slice %29 {offsets = [0, 0, 16], sizes = [1, 4, 16], strides = [1, 1, 1]} : vector<1x4x32xbf16> to vector<1x4x16xbf16>
    %37 = tpu.concatenate %35, %36 in 1 : vector<1x4x16xbf16>, vector<1x4x16xbf16> -> vector<1x8x16xbf16>
    %38 = vector.extract_strided_slice %16 {offsets = [0, 0, 0], sizes = [1, 4, 16], strides = [1, 1, 1]} : vector<1x4x32xbf16> to vector<1x4x16xbf16>
    "tpu.trace_start"() <{level = 10 : i32, message = "bik,bkj->bij"}> : () -> ()
    %cst_5 = arith.constant dense<0.000000e+00> : vector<1x4x8xf32>
    %39 = tpu.matmul %38, %23, %cst_5 {dimension_numbers = #tpu.dot_dimension_numbers<[2], [1], [1], [2], [0, 0, 0, 1, 1, 2], [0], [0]>} : vector<1x4x16xbf16>, vector<1x16x8xbf16>, vector<1x4x8xf32> -> vector<1x4x8xf32>
    "tpu.trace_stop"() : () -> ()
    %40 = vector.extract_strided_slice %27 {offsets = [0, 0, 0], sizes = [1, 4, 16], strides = [1, 1, 1]} : vector<1x4x32xbf16> to vector<1x4x16xbf16>
    "tpu.trace_start"() <{level = 10 : i32, message = "bik,bkj->bij"}> : () -> ()
    %cst_6 = arith.constant dense<0.000000e+00> : vector<1x4x8xf32>
    %41 = tpu.matmul %40, %34, %cst_6 {dimension_numbers = #tpu.dot_dimension_numbers<[2], [1], [1], [2], [0, 0, 0, 1, 1, 2], [0], [0]>} : vector<1x4x16xbf16>, vector<1x16x8xbf16>, vector<1x4x8xf32> -> vector<1x4x8xf32>
    "tpu.trace_stop"() : () -> ()
    %42 = arith.maximumf %39, %41 : vector<1x4x8xf32>
    %43 = arith.subf %39, %42 : vector<1x4x8xf32>
    %44 = math.exp %43 : vector<1x4x8xf32>
    %45 = arith.subf %41, %42 : vector<1x4x8xf32>
    %46 = math.exp %45 : vector<1x4x8xf32>
    %47 = arith.addf %44, %46 : vector<1x4x8xf32>
    %48 = tpu.reciprocal %47 {approx = true} : vector<1x4x8xf32> -> vector<1x4x8xf32>
    %49 = arith.mulf %44, %48 : vector<1x4x8xf32>
    %50 = arith.truncf %49 : vector<1x4x8xf32> to vector<1x4x8xbf16>
    "tpu.trace_start"() <{level = 10 : i32, message = "bik,bkj->bij"}> : () -> ()
    %cst_7 = arith.constant dense<0.000000e+00> : vector<1x4x16xf32>
    %51 = tpu.matmul %50, %26, %cst_7 {dimension_numbers = #tpu.dot_dimension_numbers<[2], [1], [1], [2], [0, 0, 0, 1, 1, 2], [0], [0]>} : vector<1x4x8xbf16>, vector<1x8x16xbf16>, vector<1x4x16xf32> -> vector<1x4x16xf32>
    "tpu.trace_stop"() : () -> ()
    %52 = arith.mulf %46, %48 : vector<1x4x8xf32>
    %53 = arith.truncf %52 : vector<1x4x8xf32> to vector<1x4x8xbf16>
    "tpu.trace_start"() <{level = 10 : i32, message = "bik,bkj->bij"}> : () -> ()
    %cst_8 = arith.constant dense<0.000000e+00> : vector<1x4x16xf32>
    %54 = tpu.matmul %53, %37, %cst_8 {dimension_numbers = #tpu.dot_dimension_numbers<[2], [1], [1], [2], [0, 0, 0, 1, 1, 2], [0], [0]>} : vector<1x4x8xbf16>, vector<1x8x16xbf16>, vector<1x4x16xf32> -> vector<1x4x16xf32>
    "tpu.trace_stop"() : () -> ()
    %55 = vector.extract_strided_slice %16 {offsets = [0, 0, 16], sizes = [1, 4, 16], strides = [1, 1, 1]} : vector<1x4x32xbf16> to vector<1x4x16xbf16>
    "tpu.trace_start"() <{level = 10 : i32, message = "bik,bkj->bij"}> : () -> ()
    %cst_9 = arith.constant dense<0.000000e+00> : vector<1x4x8xf32>
    %56 = tpu.matmul %55, %23, %cst_9 {dimension_numbers = #tpu.dot_dimension_numbers<[2], [1], [1], [2], [0, 0, 0, 1, 1, 2], [0], [0]>} : vector<1x4x16xbf16>, vector<1x16x8xbf16>, vector<1x4x8xf32> -> vector<1x4x8xf32>
    "tpu.trace_stop"() : () -> ()
    %57 = vector.extract_strided_slice %27 {offsets = [0, 0, 16], sizes = [1, 4, 16], strides = [1, 1, 1]} : vector<1x4x32xbf16> to vector<1x4x16xbf16>
    "tpu.trace_start"() <{level = 10 : i32, message = "bik,bkj->bij"}> : () -> ()
    %cst_10 = arith.constant dense<0.000000e+00> : vector<1x4x8xf32>
    %58 = tpu.matmul %57, %34, %cst_10 {dimension_numbers = #tpu.dot_dimension_numbers<[2], [1], [1], [2], [0, 0, 0, 1, 1, 2], [0], [0]>} : vector<1x4x16xbf16>, vector<1x16x8xbf16>, vector<1x4x8xf32> -> vector<1x4x8xf32>
    "tpu.trace_stop"() : () -> ()
    %59 = arith.maximumf %56, %58 : vector<1x4x8xf32>
    %60 = arith.subf %56, %59 : vector<1x4x8xf32>
    %61 = math.exp %60 : vector<1x4x8xf32>
    %62 = arith.subf %58, %59 : vector<1x4x8xf32>
    %63 = math.exp %62 : vector<1x4x8xf32>
    %64 = arith.addf %61, %63 : vector<1x4x8xf32>
    %65 = tpu.reciprocal %64 {approx = true} : vector<1x4x8xf32> -> vector<1x4x8xf32>
    %66 = arith.mulf %61, %65 : vector<1x4x8xf32>
    %67 = arith.truncf %66 : vector<1x4x8xf32> to vector<1x4x8xbf16>
    "tpu.trace_start"() <{level = 10 : i32, message = "bik,bkj->bij"}> : () -> ()
    %cst_11 = arith.constant dense<0.000000e+00> : vector<1x4x16xf32>
    %68 = tpu.matmul %67, %26, %cst_11 {dimension_numbers = #tpu.dot_dimension_numbers<[2], [1], [1], [2], [0, 0, 0, 1, 1, 2], [0], [0]>} : vector<1x4x8xbf16>, vector<1x8x16xbf16>, vector<1x4x16xf32> -> vector<1x4x16xf32>
    "tpu.trace_stop"() : () -> ()
    %69 = arith.mulf %63, %65 : vector<1x4x8xf32>
    %70 = arith.truncf %69 : vector<1x4x8xf32> to vector<1x4x8xbf16>
    "tpu.trace_start"() <{level = 10 : i32, message = "bik,bkj->bij"}> : () -> ()
    %cst_12 = arith.constant dense<0.000000e+00> : vector<1x4x16xf32>
    %71 = tpu.matmul %70, %37, %cst_12 {dimension_numbers = #tpu.dot_dimension_numbers<[2], [1], [1], [2], [0, 0, 0, 1, 1, 2], [0], [0]>} : vector<1x4x8xbf16>, vector<1x8x16xbf16>, vector<1x4x16xf32> -> vector<1x4x16xf32>
    "tpu.trace_stop"() : () -> ()
    %72 = tpu.concatenate %51, %68 in 2 : vector<1x4x16xf32>, vector<1x4x16xf32> -> vector<1x4x32xf32>
    %73 = tpu.concatenate %54, %71 in 2 : vector<1x4x16xf32>, vector<1x4x16xf32> -> vector<1x4x32xf32>
    %74 = tpu.concatenate %72, %73 in 1 : vector<1x4x32xf32>, vector<1x4x32xf32> -> vector<1x8x32xf32>
    %75 = vector.shape_cast %74 : vector<1x8x32xf32> to vector<8x32xf32>
    %76 = arith.truncf %75 : vector<8x32xf32> to vector<8x32xbf16>
    %c0_13 = arith.constant 0 : index
    %c0_14 = arith.constant 0 : index
    %77 = vector.load %arg4[%c0_13, %c0_14] : memref<32x32xbf16, #tpu.memory_space<vmem>>, vector<32x32xbf16>
    %cst_15 = arith.constant dense<0.000000e+00> : vector<8x32xf32>
    %78 = tpu.matmul %76, %77, %cst_15 {dimension_numbers = #tpu.dot_dimension_numbers<[1], [0], [0], [1], [0, 0, 1, 1], [], []>} : vector<8x32xbf16>, vector<32x32xbf16>, vector<8x32xf32> -> vector<8x32xf32>
    %c0_16 = arith.constant 0 : index
    %c0_17 = arith.constant 0 : index
    %79 = vector.load %arg5[%c0_16, %c0_17] : memref<1x32xf32, #tpu.memory_space<vmem>>, vector<1x32xf32>
    %80 = vector.broadcast %79 : vector<1x32xf32> to vector<8x32xf32>
    %81 = arith.addf %78, %80 : vector<8x32xf32>
    %82 = arith.addf %81, %0 : vector<8x32xf32>
    %cst_18 = arith.constant dense<0.000000e+00> : vector<8xf32>
    %83 = vector.multi_reduction <add>, %82, %cst_18 [1] : vector<8x32xf32> to vector<8xf32>
    %84 = vector.shape_cast %83 : vector<8xf32> to vector<8x1xf32>
    %cst_19 = arith.constant 3.200000e+01 : f32
    %85 = vector.broadcast %cst_19 : f32 to vector<8x1xf32>
    %86 = arith.divf %84, %85 : vector<8x1xf32>
    %87 = vector.broadcast %86 : vector<8x1xf32> to vector<8x32xf32>
    %88 = arith.subf %82, %87 : vector<8x32xf32>
    %89 = arith.mulf %88, %88 : vector<8x32xf32>
    %cst_20 = arith.constant dense<0.000000e+00> : vector<8xf32>
    %90 = vector.multi_reduction <add>, %89, %cst_20 [1] : vector<8x32xf32> to vector<8xf32>
    %91 = vector.shape_cast %90 : vector<8xf32> to vector<8x1xf32>
    %cst_21 = arith.constant 3.200000e+01 : f32
    %92 = vector.broadcast %cst_21 : f32 to vector<8x1xf32>
    %93 = arith.divf %91, %92 : vector<8x1xf32>
    %cst_22 = arith.constant 9.99999974E-6 : f32
    %94 = vector.broadcast %cst_22 : f32 to vector<8x1xf32>
    %95 = arith.addf %93, %94 : vector<8x1xf32>
    %96 = math.rsqrt %95 : vector<8x1xf32>
    %97 = vector.broadcast %96 : vector<8x1xf32> to vector<8x32xf32>
    %98 = arith.mulf %88, %97 : vector<8x32xf32>
    %c0_23 = arith.constant 0 : index
    %c0_24 = arith.constant 0 : index
    %99 = vector.load %arg6[%c0_23, %c0_24] : memref<1x32xf32, #tpu.memory_space<vmem>>, vector<1x32xf32>
    %100 = vector.broadcast %99 : vector<1x32xf32> to vector<8x32xf32>
    %101 = arith.mulf %98, %100 : vector<8x32xf32>
    %c0_25 = arith.constant 0 : index
    %c0_26 = arith.constant 0 : index
    %102 = vector.load %arg7[%c0_25, %c0_26] : memref<1x32xf32, #tpu.memory_space<vmem>>, vector<1x32xf32>
    %103 = vector.broadcast %102 : vector<1x32xf32> to vector<8x32xf32>
    %104 = arith.addf %101, %103 : vector<8x32xf32>
    %105 = arith.truncf %104 : vector<8x32xf32> to vector<8x32xbf16>
    %c0_27 = arith.constant 0 : index
    %c0_28 = arith.constant 0 : index
    %106 = vector.load %arg8[%c0_27, %c0_28] : memref<32x32xbf16, #tpu.memory_space<vmem>>, vector<32x32xbf16>
    %cst_29 = arith.constant dense<0.000000e+00> : vector<8x32xf32>
    %107 = tpu.matmul %105, %106, %cst_29 {dimension_numbers = #tpu.dot_dimension_numbers<[1], [0], [0], [1], [0, 0, 1, 1], [], []>} : vector<8x32xbf16>, vector<32x32xbf16>, vector<8x32xf32> -> vector<8x32xf32>
    %c0_30 = arith.constant 0 : index
    %c0_31 = arith.constant 0 : index
    %108 = vector.load %arg9[%c0_30, %c0_31] : memref<1x32xf32, #tpu.memory_space<vmem>>, vector<1x32xf32>
    %109 = vector.broadcast %108 : vector<1x32xf32> to vector<8x32xf32>
    %110 = arith.addf %107, %109 : vector<8x32xf32>
    %cst_32 = arith.constant 0.000000e+00 : f32
    %111 = vector.broadcast %cst_32 : f32 to vector<8x32xf32>
    %112 = arith.maximumf %110, %111 : vector<8x32xf32>
    %113 = arith.truncf %112 : vector<8x32xf32> to vector<8x32xbf16>
    %c0_33 = arith.constant 0 : index
    %c0_34 = arith.constant 0 : index
    %114 = vector.load %arg10[%c0_33, %c0_34] : memref<32x32xbf16, #tpu.memory_space<vmem>>, vector<32x32xbf16>
    %cst_35 = arith.constant dense<0.000000e+00> : vector<8x32xf32>
    %115 = tpu.matmul %113, %114, %cst_35 {dimension_numbers = #tpu.dot_dimension_numbers<[1], [0], [0], [1], [0, 0, 1, 1], [], []>} : vector<8x32xbf16>, vector<32x32xbf16>, vector<8x32xf32> -> vector<8x32xf32>
    %c0_36 = arith.constant 0 : index
    %c0_37 = arith.constant 0 : index
    %116 = vector.load %arg11[%c0_36, %c0_37] : memref<1x32xf32, #tpu.memory_space<vmem>>, vector<1x32xf32>
    %117 = vector.broadcast %116 : vector<1x32xf32> to vector<8x32xf32>
    %118 = arith.addf %115, %117 : vector<8x32xf32>
    %119 = arith.addf %118, %104 : vector<8x32xf32>
    %cst_38 = arith.constant dense<0.000000e+00> : vector<8xf32>
    %120 = vector.multi_reduction <add>, %119, %cst_38 [1] : vector<8x32xf32> to vector<8xf32>
    %121 = vector.shape_cast %120 : vector<8xf32> to vector<8x1xf32>
    %cst_39 = arith.constant 3.200000e+01 : f32
    %122 = vector.broadcast %cst_39 : f32 to vector<8x1xf32>
    %123 = arith.divf %121, %122 : vector<8x1xf32>
    %124 = vector.broadcast %123 : vector<8x1xf32> to vector<8x32xf32>
    %125 = arith.subf %119, %124 : vector<8x32xf32>
    %126 = arith.mulf %125, %125 : vector<8x32xf32>
    %cst_40 = arith.constant dense<0.000000e+00> : vector<8xf32>
    %127 = vector.multi_reduction <add>, %126, %cst_40 [1] : vector<8x32xf32> to vector<8xf32>
    %128 = vector.shape_cast %127 : vector<8xf32> to vector<8x1xf32>
    %cst_41 = arith.constant 3.200000e+01 : f32
    %129 = vector.broadcast %cst_41 : f32 to vector<8x1xf32>
    %130 = arith.divf %128, %129 : vector<8x1xf32>
    %cst_42 = arith.constant 9.99999974E-6 : f32
    %131 = vector.broadcast %cst_42 : f32 to vector<8x1xf32>
    %132 = arith.addf %130, %131 : vector<8x1xf32>
    %133 = math.rsqrt %132 : vector<8x1xf32>
    %134 = vector.broadcast %133 : vector<8x1xf32> to vector<8x32xf32>
    %135 = arith.mulf %125, %134 : vector<8x32xf32>
    %c0_43 = arith.constant 0 : index
    %c0_44 = arith.constant 0 : index
    %136 = vector.load %arg12[%c0_43, %c0_44] : memref<1x32xf32, #tpu.memory_space<vmem>>, vector<1x32xf32>
    %137 = vector.broadcast %136 : vector<1x32xf32> to vector<8x32xf32>
    %138 = arith.mulf %135, %137 : vector<8x32xf32>
    %c0_45 = arith.constant 0 : index
    %c0_46 = arith.constant 0 : index
    %139 = vector.load %arg13[%c0_45, %c0_46] : memref<1x32xf32, #tpu.memory_space<vmem>>, vector<1x32xf32>
    %140 = vector.broadcast %139 : vector<1x32xf32> to vector<8x32xf32>
    %141 = arith.addf %138, %140 : vector<8x32xf32>
    %c0_47 = arith.constant 0 : index
    %c0_48 = arith.constant 0 : index
    %142 = vector.load %arg14[%c0_47, %c0_48] : memref<8x32xf32, #tpu.memory_space<vmem>>, vector<8x32xf32>
    tpu.vector_store %arg14[%c0_47, %c0_48], %141 {strides = array<i32>} : memref<8x32xf32, #tpu.memory_space<vmem>>, vector<8x32xf32>,
    return
  }
  func.func @transform_0(%arg0: i32) -> (i32, i32) {
    %c0_i32 = arith.constant 0 : i32
    %c0_i32_0 = arith.constant 0 : i32
    return %arg0, %c0_i32 : i32, i32
  }
  func.func @transform_1(%arg0: i32) -> (i32, i32) {
    %c0_i32 = arith.constant 0 : i32
    %c0_i32_0 = arith.constant 0 : i32
    %c0_i32_1 = arith.constant 0 : i32
    return %c0_i32, %c0_i32_0 : i32, i32
  }
  func.func @transform_2(%arg0: i32) -> (i32, i32) {
    %c0_i32 = arith.constant 0 : i32
    %c0_i32_0 = arith.constant 0 : i32
    %c0_i32_1 = arith.constant 0 : i32
    return %c0_i32, %c0_i32_0 : i32, i32
  }
  func.func @transform_3(%arg0: i32) -> (i32, i32) {
    %c0_i32 = arith.constant 0 : i32
    %c0_i32_0 = arith.constant 0 : i32
    %c0_i32_1 = arith.constant 0 : i32
    return %c0_i32, %c0_i32_0 : i32, i32
  }
  func.func @transform_4(%arg0: i32) -> (i32, i32) {
    %c0_i32 = arith.constant 0 : i32
    %c0_i32_0 = arith.constant 0 : i32
    %c0_i32_1 = arith.constant 0 : i32
    return %c0_i32, %c0_i32_0 : i32, i32
  }
  func.func @transform_5(%arg0: i32) -> (i32, i32) {
    %c0_i32 = arith.constant 0 : i32
    %c0_i32_0 = arith.constant 0 : i32
    %c0_i32_1 = arith.constant 0 : i32
    return %c0_i32, %c0_i32_0 : i32, i32
  }
  func.func @transform_6(%arg0: i32) -> (i32, i32) {
    %c0_i32 = arith.constant 0 : i32
    %c0_i32_0 = arith.constant 0 : i32
    %c0_i32_1 = arith.constant 0 : i32
    return %c0_i32, %c0_i32_0 : i32, i32
  }
  func.func @transform_7(%arg0: i32) -> (i32, i32) {
    %c0_i32 = arith.constant 0 : i32
    %c0_i32_0 = arith.constant 0 : i32
    %c0_i32_1 = arith.constant 0 : i32
    return %c0_i32, %c0_i32_0 : i32, i32
  }
  func.func @transform_8(%arg0: i32) -> (i32, i32) {
    %c0_i32 = arith.constant 0 : i32
    %c0_i32_0 = arith.constant 0 : i32
    %c0_i32_1 = arith.constant 0 : i32
    return %c0_i32, %c0_i32_0 : i32, i32
  }
  func.func @transform_9(%arg0: i32) -> (i32, i32) {
    %c0_i32 = arith.constant 0 : i32
    %c0_i32_0 = arith.constant 0 : i32
    %c0_i32_1 = arith.constant 0 : i32
    return %c0_i32, %c0_i32_0 : i32, i32
  }
  func.func @transform_10(%arg0: i32) -> (i32, i32) {
    %c0_i32 = arith.constant 0 : i32
    %c0_i32_0 = arith.constant 0 : i32
    %c0_i32_1 = arith.constant 0 : i32
    return %c0_i32, %c0_i32_0 : i32, i32
  }
  func.func @transform_11(%arg0: i32) -> (i32, i32) {
    %c0_i32 = arith.constant 0 : i32
    %c0_i32_0 = arith.constant 0 : i32
    %c0_i32_1 = arith.constant 0 : i32
    return %c0_i32, %c0_i32_0 : i32, i32
  }
  func.func @transform_12(%arg0: i32) -> (i32, i32) {
    %c0_i32 = arith.constant 0 : i32
    %c0_i32_0 = arith.constant 0 : i32
    %c0_i32_1 = arith.constant 0 : i32
    return %c0_i32, %c0_i32_0 : i32, i32
  }
  func.func @transform_13(%arg0: i32) -> (i32, i32) {
    %c0_i32 = arith.constant 0 : i32
    %c0_i32_0 = arith.constant 0 : i32
    return %arg0, %c0_i32 : i32, i32
  }
}

</mosaic_0001>

<llo_original>
// kernel: tpu_custom_call.1
$region0: #{tpu_custom_call.1}
  #allocation0 [shape = 'u32[]', space=smem, size = 0x4, offset = 0x4, fixed_abs, tag = 'smem constant byte address 0x4 - core index']
  #allocation1 [shape = 'u32[144,128]{1,0:T(1,128)}', space=vmem, size = 0x12000, scoped, tag = 'internal scratch']
  %s0 = inlined_call_operand.hbm [shape: f32[16,32], index: 0, kind: input, shape index: {}]
  %s1 = inlined_call_operand.hbm [shape: bf16[32,96], index: 1, kind: input, shape index: {}]
  %s2 = inlined_call_operand.vmem [shape: f32[1,96], index: 2, kind: input, shape index: {}]
  %s3 = inlined_call_operand.hbm [shape: bf16[32,32], index: 3, kind: input, shape index: {}]
  %s4 = inlined_call_operand.vmem [shape: f32[1,32], index: 4, kind: input, shape index: {}]
  %s5 = inlined_call_operand.hbm [shape: f32[1,32], index: 5, kind: input, shape index: {}]
  %s6 = inlined_call_operand.hbm [shape: f32[1,32], index: 6, kind: input, shape index: {}]
  %s7 = inlined_call_operand.vmem [shape: bf16[32,32], index: 7, kind: input, shape index: {}]
  %s8 = inlined_call_operand.hbm [shape: f32[1,32], index: 8, kind: input, shape index: {}]
  %s9 = inlined_call_operand.vmem [shape: bf16[32,32], index: 9, kind: input, shape index: {}]
  %s10 = inlined_call_operand.vmem [shape: f32[1,32], index: 10, kind: input, shape index: {}]
  %s11 = inlined_call_operand.vmem [shape: f32[1,32], index: 11, kind: input, shape index: {}]
  %s12 = inlined_call_operand.vmem [shape: f32[1,32], index: 12, kind: input, shape index: {}]
  %s13 = inlined_call_operand.hbm [shape: f32[16,32], index: 13, kind: output, shape index: {}]
  %s14 = sld [smem:[#allocation0]]
  $region109: #{tpu_custom_call.1} parent=0
    _
  %s16 = ssub.s32 1, %s14
  %s17 = scalar_select 0, %s16, %s14
  $region1: #{tpu_custom_call.1} parent=0
    #allocation2 [shape = 'u8[8192]{0}', space=vmem, size = 0x2000, scoped, tag = 'input window, operand 0']
    #allocation3 [shape = 's32[2]{0}', space=sflag, size = 0x8, scoped, tag = 'scoped memory for tpu_custom_call.1']
    #allocation4 [shape = 's32[2]{0}', space=sflag, size = 0x8, scoped, tag = 'scoped memory for tpu_custom_call.1']
    #allocation5 [shape = 'u8[8192]{0}', space=vmem, size = 0x2000, scoped, tag = 'input window, operand 1, single buffered']
    #allocation6 [shape = 's32[1]{0}', space=sflag, size = 0x4, scoped, tag = 'scoped memory for tpu_custom_call.1']
    #allocation7 [shape = 'u8[8192]{0}', space=vmem, size = 0x2000, scoped, tag = 'input window, operand 3, single buffered']
    #allocation8 [shape = 'u8[512]{0}', space=vmem, size = 0x400, scoped, tag = 'input window, operand 5, single buffered']
    #allocation9 [shape = 's32[1]{0}', space=sflag, size = 0x4, scoped, tag = 'scoped memory for tpu_custom_call.1']
    #allocation10 [shape = 'u8[512]{0}', space=vmem, size = 0x400, scoped, tag = 'input window, operand 6, single buffered']
    #allocation11 [shape = 'u8[512]{0}', space=vmem, size = 0x400, scoped, tag = 'input window, operand 8, single buffered']
    #allocation12 [shape = 's32[1]{0}', space=sflag, size = 0x4, scoped, tag = 'scoped memory for tpu_custom_call.1']
    #allocation13 [shape = 'u8[8192]{0}', space=vmem, size = 0x2000, scoped, tag = 'output window, operand 0']
    %18 = vsyncpa [#allocation3], 0
    %s19 = scalar_lea.sflag [#allocation3], 1
    %20 = vsyncpa %s19, 0
    %21 = vsyncpa [#allocation6], 0
    %22 = vsyncpa [#allocation9], 0
    %23 = vsyncpa [#allocation12], 0
    %24 = vsyncpa [#allocation4], 0
    %s25 = scalar_lea.sflag [#allocation4], 1
    %26 = vsyncpa %s25, 0
    loop: start=0, step=1, limit=4
    $region2: #{tpu_custom_call.1} parent=1 // loop_pre_header
      _
    $region3: #{tpu_custom_call.1} parent=1 // loop_header
      %s28 = sphi 0, %s32
      %p29 = scmp.ge.s32.totalorder %s28, 4
      %s38 = sphi 0, %s40
      %s41 = sphi 0, %s38
      %s42 = sphi 0, %s41
      %s58 = sphi 0, %s42
      %s62 = sphi 0, %s62
      %s64 = sphi 0, %s62
      %s65 = sphi 0, %s64
      %s79 = sphi 0, %s65
      %s83 = sphi 0, %s83
      %s85 = sphi 0, %s83
      %s86 = sphi 0, %s85
      %s100 = sphi 0, %s86
      %s104 = sphi 0, %s104
      %s106 = sphi 0, %s104
      %s107 = sphi 0, %s106
      %s121 = sphi 0, %s107
      %s125 = sphi 0, %s125
      %s127 = sphi 0, %s125
      %s128 = sphi 0, %s127
      %s142 = sphi 0, %s128
      %s146 = sphi 0, %s146
      %s148 = sphi 0, %s146
      %s149 = sphi 0, %s148
      %s163 = sphi 0, %s149
      %s167 = sphi 0, %s167
      %s169 = sphi 0, %s167
      %s170 = sphi 0, %s169
      %s184 = sphi 0, %s170
      %s188 = sphi 0, %s188
      %s190 = sphi 0, %s188
      %s191 = sphi 0, %s190
      %s205 = sphi 0, %s191
      %s209 = sphi 0, %s209
      %s211 = sphi 0, %s209
      %s212 = sphi 0, %s211
      %s226 = sphi 0, %s212
      %s230 = sphi 0, %s230
      %s232 = sphi 0, %s230
      %s233 = sphi 0, %s232
      %s247 = sphi 0, %s233
      %s251 = sphi 0, %s251
      %s253 = sphi 0, %s251
      %s254 = sphi 0, %s253
      %s268 = sphi 0, %s254
      %s272 = sphi 0, %s272
      %s274 = sphi 0, %s272
      %s275 = sphi 0, %s274
      %s289 = sphi 0, %s275
      %s293 = sphi 0, %s293
      %s295 = sphi 0, %s293
      %s296 = sphi 0, %s295
      %s310 = sphi 0, %s296
      %s316 = sphi 0, %s318
      %s319 = sphi 0, %s316
      %s320 = sphi 0, %s319
      %s336 = sphi 0, %s320
    $region4: #{tpu_custom_call.1} parent=1 // loop_header_branch
      %31 = sbr.rel (%p29) target = $region8
    $region5: #{tpu_custom_call.1} parent=1 // loop_body
      %s33 = ssub.s32 %s28, 1
      %s34 = ssub.s32 %s28, 2
      %s35 = sadd.s32 %s28, 1
      %s36 = ssub.s32 %s28, %s35
      %p37 = scmp.eq.s32.totalorder %s36, 0
      %s39 = sadd.s32 %s38, 1
      %s40 = scalar_select %p37, %s38, %s39
      %p43 = pneg %p37
      %p44 = scmp.eq.s32.totalorder %s28, 1
      %p45 = por %p43, %p44
      %p46 = scmp.ne.s32.totalorder %s38, %s41
      %p47 = scmp.eq.s32.totalorder %s28, 0
      %p48 = por %p46, %p47
      %p49 = scmp.ne.s32.totalorder %s38, %s41
      %p50 = scmp.eq.s32.totalorder %s33, 1
      %p51 = por %p49, %p50
      %p52 = scmp.ne.s32.totalorder %s41, %s42
      %p53 = scmp.eq.s32.totalorder %s33, 0
      %p54 = por %p52, %p53
      %p55 = scmp.ne.s32.totalorder %s41, %s42
      %p56 = scmp.eq.s32.totalorder %s34, 1
      %p57 = por %p55, %p56
      %p59 = scmp.ne.s32.totalorder %s42, %s58
      %p60 = scmp.eq.s32.totalorder %s34, 0
      %p61 = por %p59, %p60
      %s63 = sadd.s32 %s62, 1
      %p66 = scmp.eq.s32.totalorder %s28, 1
      %p67 = scmp.ne.s32.totalorder %s62, %s64
      %p68 = scmp.eq.s32.totalorder %s28, 0
      %p69 = por %p67, %p68
      %p70 = scmp.ne.s32.totalorder %s62, %s64
      %p71 = scmp.eq.s32.totalorder %s33, 1
      %p72 = por %p70, %p71
      %p73 = scmp.ne.s32.totalorder %s64, %s65
      %p74 = scmp.eq.s32.totalorder %s33, 0
      %p75 = por %p73, %p74
      %p76 = scmp.ne.s32.totalorder %s64, %s65
      %p77 = scmp.eq.s32.totalorder %s34, 1
      %p78 = por %p76, %p77
      %p80 = scmp.ne.s32.totalorder %s65, %s79
      %p81 = scmp.eq.s32.totalorder %s34, 0
      %p82 = por %p80, %p81
      %s84 = sadd.s32 %s83, 1
      %p87 = scmp.eq.s32.totalorder %s28, 1
      %p88 = scmp.ne.s32.totalorder %s83, %s85
      %p89 = scmp.eq.s32.totalorder %s28, 0
      %p90 = por %p88, %p89
      %p91 = scmp.ne.s32.totalorder %s83, %s85
      %p92 = scmp.eq.s32.totalorder %s33, 1
      %p93 = por %p91, %p92
      %p94 = scmp.ne.s32.totalorder %s85, %s86
      %p95 = scmp.eq.s32.totalorder %s33, 0
      %p96 = por %p94, %p95
      %p97 = scmp.ne.s32.totalorder %s85, %s86
      %p98 = scmp.eq.s32.totalorder %s34, 1
      %p99 = por %p97, %p98
      %p101 = scmp.ne.s32.totalorder %s86, %s100
      %p102 = scmp.eq.s32.totalorder %s34, 0
      %p103 = por %p101, %p102
      %s105 = sadd.s32 %s104, 1
      %p108 = scmp.eq.s32.totalorder %s28, 1
      %p109 = scmp.ne.s32.totalorder %s104, %s106
      %p110 = scmp.eq.s32.totalorder %s28, 0
      %p111 = por %p109, %p110
      %p112 = scmp.ne.s32.totalorder %s104, %s106
      %p113 = scmp.eq.s32.totalorder %s33, 1
      %p114 = por %p112, %p113
      %p115 = scmp.ne.s32.totalorder %s106, %s107
      %p116 = scmp.eq.s32.totalorder %s33, 0
      %p117 = por %p115, %p116
      %p118 = scmp.ne.s32.totalorder %s106, %s107
      %p119 = scmp.eq.s32.totalorder %s34, 1
      %p120 = por %p118, %p119
      %p122 = scmp.ne.s32.totalorder %s107, %s121
      %p123 = scmp.eq.s32.totalorder %s34, 0
      %p124 = por %p122, %p123
      %s126 = sadd.s32 %s125, 1
      %p129 = scmp.eq.s32.totalorder %s28, 1
      %p130 = scmp.ne.s32.totalorder %s125, %s127
      %p131 = scmp.eq.s32.totalorder %s28, 0
      %p132 = por %p130, %p131
      %p133 = scmp.ne.s32.totalorder %s125, %s127
      %p134 = scmp.eq.s32.totalorder %s33, 1
      %p135 = por %p133, %p134
      %p136 = scmp.ne.s32.totalorder %s127, %s128
      %p137 = scmp.eq.s32.totalorder %s33, 0
      %p138 = por %p136, %p137
      %p139 = scmp.ne.s32.totalorder %s127, %s128
      %p140 = scmp.eq.s32.totalorder %s34, 1
      %p141 = por %p139, %p140
      %p143 = scmp.ne.s32.totalorder %s128, %s142
      %p144 = scmp.eq.s32.totalorder %s34, 0
      %p145 = por %p143, %p144
      %s147 = sadd.s32 %s146, 1
      %p150 = scmp.eq.s32.totalorder %s28, 1
      %p151 = scmp.ne.s32.totalorder %s146, %s148
      %p152 = scmp.eq.s32.totalorder %s28, 0
      %p153 = por %p151, %p152
      %p154 = scmp.ne.s32.totalorder %s146, %s148
      %p155 = scmp.eq.s32.totalorder %s33, 1
      %p156 = por %p154, %p155
      %p157 = scmp.ne.s32.totalorder %s148, %s149
      %p158 = scmp.eq.s32.totalorder %s33, 0
      %p159 = por %p157, %p158
      %p160 = scmp.ne.s32.totalorder %s148, %s149
      %p161 = scmp.eq.s32.totalorder %s34, 1
      %p162 = por %p160, %p161
      %p164 = scmp.ne.s32.totalorder %s149, %s163
      %p165 = scmp.eq.s32.totalorder %s34, 0
      %p166 = por %p164, %p165
      %s168 = sadd.s32 %s167, 1
      %p171 = scmp.eq.s32.totalorder %s28, 1
      %p172 = scmp.ne.s32.totalorder %s167, %s169
      %p173 = scmp.eq.s32.totalorder %s28, 0
      %p174 = por %p172, %p173
      %p175 = scmp.ne.s32.totalorder %s167, %s169
      %p176 = scmp.eq.s32.totalorder %s33, 1
      %p177 = por %p175, %p176
      %p178 = scmp.ne.s32.totalorder %s169, %s170
      %p179 = scmp.eq.s32.totalorder %s33, 0
      %p180 = por %p178, %p179
      %p181 = scmp.ne.s32.totalorder %s169, %s170
      %p182 = scmp.eq.s32.totalorder %s34, 1
      %p183 = por %p181, %p182
      %p185 = scmp.ne.s32.totalorder %s170, %s184
      %p186 = scmp.eq.s32.totalorder %s34, 0
      %p187 = por %p185, %p186
      %s189 = sadd.s32 %s188, 1
      %p192 = scmp.eq.s32.totalorder %s28, 1
      %p193 = scmp.ne.s32.totalorder %s188, %s190
      %p194 = scmp.eq.s32.totalorder %s28, 0
      %p195 = por %p193, %p194
      %p196 = scmp.ne.s32.totalorder %s188, %s190
      %p197 = scmp.eq.s32.totalorder %s33, 1
      %p198 = por %p196, %p197
      %p199 = scmp.ne.s32.totalorder %s190, %s191
      %p200 = scmp.eq.s32.totalorder %s33, 0
      %p201 = por %p199, %p200
      %p202 = scmp.ne.s32.totalorder %s190, %s191
      %p203 = scmp.eq.s32.totalorder %s34, 1
      %p204 = por %p202, %p203
      %p206 = scmp.ne.s32.totalorder %s191, %s205
      %p207 = scmp.eq.s32.totalorder %s34, 0
      %p208 = por %p206, %p207
      %s210 = sadd.s32 %s209, 1
      %p213 = scmp.eq.s32.totalorder %s28, 1
      %p214 = scmp.ne.s32.totalorder %s209, %s211
      %p215 = scmp.eq.s32.totalorder %s28, 0
      %p216 = por %p214, %p215
      %p217 = scmp.ne.s32.totalorder %s209, %s211
      %p218 = scmp.eq.s32.totalorder %s33, 1
      %p219 = por %p217, %p218
      %p220 = scmp.ne.s32.totalorder %s211, %s212
      %p221 = scmp.eq.s32.totalorder %s33, 0
      %p222 = por %p220, %p221
      %p223 = scmp.ne.s32.totalorder %s211, %s212
      %p224 = scmp.eq.s32.totalorder %s34, 1
      %p225 = por %p223, %p224
      %p227 = scmp.ne.s32.totalorder %s212, %s226
      %p228 = scmp.eq.s32.totalorder %s34, 0
      %p229 = por %p227, %p228
      %s231 = sadd.s32 %s230, 1
      %p234 = scmp.eq.s32.totalorder %s28, 1
      %p235 = scmp.ne.s32.totalorder %s230, %s232
      %p236 = scmp.eq.s32.totalorder %s28, 0
      %p237 = por %p235, %p236
      %p238 = scmp.ne.s32.totalorder %s230, %s232
      %p239 = scmp.eq.s32.totalorder %s33, 1
      %p240 = por %p238, %p239
      %p241 = scmp.ne.s32.totalorder %s232, %s233
      %p242 = scmp.eq.s32.totalorder %s33, 0
      %p243 = por %p241, %p242
      %p244 = scmp.ne.s32.totalorder %s232, %s233
      %p245 = scmp.eq.s32.totalorder %s34, 1
      %p246 = por %p244, %p245
      %p248 = scmp.ne.s32.totalorder %s233, %s247
      %p249 = scmp.eq.s32.totalorder %s34, 0
      %p250 = por %p248, %p249
      %s252 = sadd.s32 %s251, 1
      %p255 = scmp.eq.s32.totalorder %s28, 1
      %p256 = scmp.ne.s32.totalorder %s251, %s253
      %p257 = scmp.eq.s32.totalorder %s28, 0
      %p258 = por %p256, %p257
      %p259 = scmp.ne.s32.totalorder %s251, %s253
      %p260 = scmp.eq.s32.totalorder %s33, 1
      %p261 = por %p259, %p260
      %p262 = scmp.ne.s32.totalorder %s253, %s254
      %p263 = scmp.eq.s32.totalorder %s33, 0
      %p264 = por %p262, %p263
      %p265 = scmp.ne.s32.totalorder %s253, %s254
      %p266 = scmp.eq.s32.totalorder %s34, 1
      %p267 = por %p265, %p266
      %p269 = scmp.ne.s32.totalorder %s254, %s268
      %p270 = scmp.eq.s32.totalorder %s34, 0
      %p271 = por %p269, %p270
      %s273 = sadd.s32 %s272, 1
      %p276 = scmp.eq.s32.totalorder %s28, 1
      %p277 = scmp.ne.s32.totalorder %s272, %s274
      %p278 = scmp.eq.s32.totalorder %s28, 0
      %p279 = por %p277, %p278
      %p280 = scmp.ne.s32.totalorder %s272, %s274
      %p281 = scmp.eq.s32.totalorder %s33, 1
      %p282 = por %p280, %p281
      %p283 = scmp.ne.s32.totalorder %s274, %s275
      %p284 = scmp.eq.s32.totalorder %s33, 0
      %p285 = por %p283, %p284
      %p286 = scmp.ne.s32.totalorder %s274, %s275
      %p287 = scmp.eq.s32.totalorder %s34, 1
      %p288 = por %p286, %p287
      %p290 = scmp.ne.s32.totalorder %s275, %s289
      %p291 = scmp.eq.s32.totalorder %s34, 0
      %p292 = por %p290, %p291
      %s294 = sadd.s32 %s293, 1
      %p297 = scmp.eq.s32.totalorder %s28, 1
      %p298 = scmp.ne.s32.totalorder %s293, %s295
      %p299 = scmp.eq.s32.totalorder %s28, 0
      %p300 = por %p298, %p299
      %p301 = scmp.ne.s32.totalorder %s293, %s295
      %p302 = scmp.eq.s32.totalorder %s33, 1
      %p303 = por %p301, %p302
      %p304 = scmp.ne.s32.totalorder %s295, %s296
      %p305 = scmp.eq.s32.totalorder %s33, 0
      %p306 = por %p304, %p305
      %p307 = scmp.ne.s32.totalorder %s295, %s296
      %p308 = scmp.eq.s32.totalorder %s34, 1
      %p309 = por %p307, %p308
      %p311 = scmp.ne.s32.totalorder %s296, %s310
      %p312 = scmp.eq.s32.totalorder %s34, 0
      %p313 = por %p311, %p312
      %s314 = ssub.s32 %s28, %s35
      %p315 = scmp.eq.s32.totalorder %s314, 0
      %s317 = sadd.s32 %s316, 1
      %s318 = scalar_select %p315, %s316, %s317
      %p321 = pneg %p315
      %p322 = scmp.eq.s32.totalorder %s28, 1
      %p323 = por %p321, %p322
      %p324 = scmp.ne.s32.totalorder %s316, %s319
      %p325 = scmp.eq.s32.totalorder %s28, 0
      %p326 = por %p324, %p325
      %p327 = scmp.ne.s32.totalorder %s316, %s319
      %p328 = scmp.eq.s32.totalorder %s33, 1
      %p329 = por %p327, %p328
      %p330 = scmp.ne.s32.totalorder %s319, %s320
      %p331 = scmp.eq.s32.totalorder %s33, 0
      %p332 = por %p330, %p331
      %p333 = scmp.ne.s32.totalorder %s319, %s320
      %p334 = scmp.eq.s32.totalorder %s34, 1
      %p335 = por %p333, %p334
      %p337 = scmp.ne.s32.totalorder %s320, %s336
      %p338 = scmp.eq.s32.totalorder %s34, 0
      %p339 = por %p337, %p338
      %p340 = scmp.le.s32.totalorder 1, %s28
      %p341 = scmp.lt.s32.totalorder %s28, 3
      %p342 = pnand %p340, %p341
      %p343 = pneg %p342
      // Predicated region
      $region9: #{tpu_custom_call.1} parent=5 // pred_check
        _
      $region10: #{tpu_custom_call.1} parent=5 // pred_check_branch
        %345 = sbr.rel (%p342) target = $region12
      $region11: #{tpu_custom_call.1} parent=5 // pred_region
        %s346 = ssub.s32 %s28, 1
        // Predicated region
        $region13: #{tpu_custom_call.1} parent=11 // pred_check
          %p347 = pneg %p75
        $region14: #{tpu_custom_call.1} parent=11 // pred_check_branch
          %349 = sbr.rel (%p347) target = $region16
        $region15: #{tpu_custom_call.1} parent=11 // pred_region
          %s351 = ssub.s32 256, 256
          %352 = vsyncadd [#allocation6], %s351
          %s353 = sshll.u32 [#allocation5], 4
          %s354 = int_to_ptr.vmem [resolvable:$true] %s353
          %359 = dma.hbm_to_vmem [thread:$0]  %s1, 256, %s354, [#allocation6], 64, 64, 4
        $region16: #{tpu_custom_call.1} parent=11 // pred_fallthru
          _
        // Predicated region
        $region17: #{tpu_custom_call.1} parent=11 // pred_check
          %p360 = pneg %p96
        $region18: #{tpu_custom_call.1} parent=11 // pred_check_branch
          %362 = sbr.rel (%p360) target = $region20
        $region19: #{tpu_custom_call.1} parent=11 // pred_region
          _
        $region20: #{tpu_custom_call.1} parent=11 // pred_fallthru
          _
        // Predicated region
        $region21: #{tpu_custom_call.1} parent=11 // pred_check
          %p363 = pneg %p117
        $region22: #{tpu_custom_call.1} parent=11 // pred_check_branch
          %365 = sbr.rel (%p363) target = $region24
        $region23: #{tpu_custom_call.1} parent=11 // pred_region
          %s367 = ssub.s32 256, 256
          %368 = vsyncadd [#allocation6], %s367
          %s369 = sshll.u32 [#allocation7], 4
          %s370 = int_to_ptr.vmem [resolvable:$true] %s369
          %375 = dma.hbm_to_vmem [thread:$0]  %s3, 256, %s370, [#allocation6], 64, 64, 4
        $region24: #{tpu_custom_call.1} parent=11 // pred_fallthru
          _
        // Predicated region
        $region25: #{tpu_custom_call.1} parent=11 // pred_check
          %p376 = pneg %p138
        $region26: #{tpu_custom_call.1} parent=11 // pred_check_branch
          %378 = sbr.rel (%p376) target = $region28
        $region27: #{tpu_custom_call.1} parent=11 // pred_region
          _
        $region28: #{tpu_custom_call.1} parent=11 // pred_fallthru
          _
        // Predicated region
        $region29: #{tpu_custom_call.1} parent=11 // pred_check
          %p379 = pneg %p159
        $region30: #{tpu_custom_call.1} parent=11 // pred_check_branch
          %381 = sbr.rel (%p379) target = $region32
        $region31: #{tpu_custom_call.1} parent=11 // pred_region
          %s383 = ssub.s32 16, 16
          %384 = vsyncadd [#allocation9], %s383
          %s386 = sshll.u32 [#allocation8], 4
          %s387 = int_to_ptr.vmem [resolvable:$true] %s386
          %389 = dma.hbm_to_vmem [thread:$0]  %s5, 16, %s387, [#allocation9]
        $region32: #{tpu_custom_call.1} parent=11 // pred_fallthru
          _
        // Predicated region
        $region33: #{tpu_custom_call.1} parent=11 // pred_check
          %p390 = pneg %p180
        $region34: #{tpu_custom_call.1} parent=11 // pred_check_branch
          %392 = sbr.rel (%p390) target = $region36
        $region35: #{tpu_custom_call.1} parent=11 // pred_region
          %s394 = ssub.s32 16, 16
          %395 = vsyncadd [#allocation9], %s394
          %s397 = sshll.u32 [#allocation10], 4
          %s398 = int_to_ptr.vmem [resolvable:$true] %s397
          %400 = dma.hbm_to_vmem [thread:$0]  %s6, 16, %s398, [#allocation9]
        $region36: #{tpu_custom_call.1} parent=11 // pred_fallthru
          _
        // Predicated region
        $region37: #{tpu_custom_call.1} parent=11 // pred_check
          %p401 = pneg %p201
        $region38: #{tpu_custom_call.1} parent=11 // pred_check_branch
          %403 = sbr.rel (%p401) target = $region40
        $region39: #{tpu_custom_call.1} parent=11 // pred_region
          _
        $region40: #{tpu_custom_call.1} parent=11 // pred_fallthru
          _
        // Predicated region
        $region41: #{tpu_custom_call.1} parent=11 // pred_check
          %p404 = pneg %p222
        $region42: #{tpu_custom_call.1} parent=11 // pred_check_branch
          %406 = sbr.rel (%p404) target = $region44
        $region43: #{tpu_custom_call.1} parent=11 // pred_region
          %s408 = ssub.s32 16, 16
          %409 = vsyncadd [#allocation12], %s408
          %s411 = sshll.u32 [#allocation11], 4
          %s412 = int_to_ptr.vmem [resolvable:$true] %s411
          %414 = dma.hbm_to_vmem [thread:$0]  %s8, 16, %s412, [#allocation12]
        $region44: #{tpu_custom_call.1} parent=11 // pred_fallthru
          _
        // Predicated region
        $region45: #{tpu_custom_call.1} parent=11 // pred_check
          %p415 = pneg %p243
        $region46: #{tpu_custom_call.1} parent=11 // pred_check_branch
          %417 = sbr.rel (%p415) target = $region48
        $region47: #{tpu_custom_call.1} parent=11 // pred_region
          _
        $region48: #{tpu_custom_call.1} parent=11 // pred_fallthru
          _
        // Predicated region
        $region49: #{tpu_custom_call.1} parent=11 // pred_check
          %p418 = pneg %p264
        $region50: #{tpu_custom_call.1} parent=11 // pred_check_branch
          %420 = sbr.rel (%p418) target = $region52
        $region51: #{tpu_custom_call.1} parent=11 // pred_region
          _
        $region52: #{tpu_custom_call.1} parent=11 // pred_fallthru
          _
        // Predicated region
        $region53: #{tpu_custom_call.1} parent=11 // pred_check
          %p421 = pneg %p285
        $region54: #{tpu_custom_call.1} parent=11 // pred_check_branch
          %423 = sbr.rel (%p421) target = $region56
        $region55: #{tpu_custom_call.1} parent=11 // pred_region
          _
        $region56: #{tpu_custom_call.1} parent=11 // pred_fallthru
          _
        // Predicated region
        $region57: #{tpu_custom_call.1} parent=11 // pred_check
          %p424 = pneg %p306
        $region58: #{tpu_custom_call.1} parent=11 // pred_check_branch
          %426 = sbr.rel (%p424) target = $region60
        $region59: #{tpu_custom_call.1} parent=11 // pred_region
          _
        $region60: #{tpu_custom_call.1} parent=11 // pred_fallthru
          _
      $region12: #{tpu_custom_call.1} parent=5 // pred_fallthru
        _
      %p427 = scmp.lt.s32.totalorder %s28, 2
      // Predicated region
      $region61: #{tpu_custom_call.1} parent=5 // pred_check
        %p428 = pneg %p427
      $region62: #{tpu_custom_call.1} parent=5 // pred_check_branch
        %430 = sbr.rel (%p428) target = $region64
      $region63: #{tpu_custom_call.1} parent=5 // pred_region
        // Predicated region
        $region65: #{tpu_custom_call.1} parent=63 // pred_check
          %p431 = pneg %p48
        $region66: #{tpu_custom_call.1} parent=63 // pred_check_branch
          %433 = sbr.rel (%p431) target = $region68
        $region67: #{tpu_custom_call.1} parent=63 // pred_region
          %s434 = sand.u32 %s38, 1
          %s435 = scalar_lea.sflag [#allocation3], %s434
          %s436 = sand.u32 %s38, 1
          %s437 = smul.addr %s436, 8
          %s438 = scalar_lea.vmem [#allocation2], %s437
          %s440 = ssub.s32 128, 128
          %441 = vsyncadd %s435, %s440
          %s442 = smul.addr %s28, 128
          %s443 = scalar_lea.hbm %s0, %s442
          %s445 = sshll.u32 %s438, 4
          %s446 = int_to_ptr.vmem [resolvable:$true] %s445
          %448 = dma.hbm_to_vmem [thread:$0]  %s443, 128, %s446, %s435
        $region68: #{tpu_custom_call.1} parent=63 // pred_fallthru
          _
      $region64: #{tpu_custom_call.1} parent=5 // pred_fallthru
        _
      %p449 = scmp.le.s32.totalorder 1, %s28
      %p450 = scmp.lt.s32.totalorder %s28, 3
      %p451 = pnand %p449, %p450
      %p452 = pneg %p451
      // Predicated region
      $region69: #{tpu_custom_call.1} parent=5 // pred_check
        _
      $region70: #{tpu_custom_call.1} parent=5 // pred_check_branch
        %454 = sbr.rel (%p451) target = $region72
      $region71: #{tpu_custom_call.1} parent=5 // pred_region
        %s455 = ssub.s32 %s28, 1
        %s456 = sand.u32 %s41, 1
        %s457 = scalar_lea.sflag [#allocation3], %s456
        %s458 = sand.u32 %s41, 1
        %s459 = smul.addr %s458, 8
        %s460 = scalar_lea.vmem [#allocation2], %s459
        // Predicated region
        $region73: #{tpu_custom_call.1} parent=71 // pred_check
          %p461 = pneg %p54
        $region74: #{tpu_custom_call.1} parent=71 // pred_check_branch
          %463 = sbr.rel (%p461) target = $region76
        $region75: #{tpu_custom_call.1} parent=71 // pred_region
          %464 = dma.done %s457, 128
        $region76: #{tpu_custom_call.1} parent=71 // pred_fallthru
          _
        // Predicated region
        $region77: #{tpu_custom_call.1} parent=71 // pred_check
          %p465 = pneg %p75
        $region78: #{tpu_custom_call.1} parent=71 // pred_check_branch
          %467 = sbr.rel (%p465) target = $region80
        $region79: #{tpu_custom_call.1} parent=71 // pred_region
          %468 = dma.done [#allocation6], 256
        $region80: #{tpu_custom_call.1} parent=71 // pred_fallthru
          _
        // Predicated region
        $region81: #{tpu_custom_call.1} parent=71 // pred_check
          %p469 = pneg %p117
        $region82: #{tpu_custom_call.1} parent=71 // pred_check_branch
          %471 = sbr.rel (%p469) target = $region84
        $region83: #{tpu_custom_call.1} parent=71 // pred_region
          %472 = dma.done [#allocation6], 256
        $region84: #{tpu_custom_call.1} parent=71 // pred_fallthru
          _
        // Predicated region
        $region85: #{tpu_custom_call.1} parent=71 // pred_check
          %p473 = pneg %p159
        $region86: #{tpu_custom_call.1} parent=71 // pred_check_branch
          %475 = sbr.rel (%p473) target = $region88
        $region87: #{tpu_custom_call.1} parent=71 // pred_region
          %476 = dma.done [#allocation9], 16
        $region88: #{tpu_custom_call.1} parent=71 // pred_fallthru
          _
        // Predicated region
        $region89: #{tpu_custom_call.1} parent=71 // pred_check
          %p477 = pneg %p180
        $region90: #{tpu_custom_call.1} parent=71 // pred_check_branch
          %479 = sbr.rel (%p477) target = $region92
        $region91: #{tpu_custom_call.1} parent=71 // pred_region
          %480 = dma.done [#allocation9], 16
        $region92: #{tpu_custom_call.1} parent=71 // pred_fallthru
          _
        // Predicated region
        $region93: #{tpu_custom_call.1} parent=71 // pred_check
          %p481 = pneg %p222
        $region94: #{tpu_custom_call.1} parent=71 // pred_check_branch
          %483 = sbr.rel (%p481) target = $region96
        $region95: #{tpu_custom_call.1} parent=71 // pred_region
          %484 = dma.done [#allocation12], 16
        $region96: #{tpu_custom_call.1} parent=71 // pred_fallthru
          _
        %s485 = sand.u32 %s41, 1
        %s486 = scalar_lea.sflag [#allocation3], %s485
        %s487 = sand.u32 %s41, 1
        %s488 = smul.addr %s487, 8
        %s489 = scalar_lea.vmem [#allocation2], %s488
        %p490 = pneg %p54
        %p491 = pneg %p51
        %p492 = pneg %p75
        %p493 = pneg %p72
        %p494 = pneg %p96
        %p495 = pneg %p93
        %p496 = pneg %p117
        %p497 = pneg %p114
        %p498 = pneg %p138
        %p499 = pneg %p135
        %p500 = pneg %p159
        %p501 = pneg %p156
        %p502 = pneg %p180
        %p503 = pneg %p177
        %p504 = pneg %p201
        %p505 = pneg %p198
        %p506 = pneg %p222
        %p507 = pneg %p219
        %p508 = pneg %p243
        %p509 = pneg %p240
        %p510 = pneg %p264
        %p511 = pneg %p261
        %p512 = pneg %p285
        %p513 = pneg %p282
        %p514 = pneg %p306
        %p515 = pneg %p303
        %p516 = pneg %p332
        %p517 = pneg %p329
        %s518 = sand.u32 %s319, 1
        %s519 = scalar_lea.sflag [#allocation4], %s518
        %s520 = sand.u32 %s319, 1
        %s521 = smul.addr %s520, 8
        %s522 = scalar_lea.vmem [#allocation13], %s521
        %v524 = vld [vmem:[%s460] sm:$0xff]
        %v525 = vpack.c.bf16 %v524, %v524
        %v526 = vld [vmem:[#allocation5] sm:$0xf]
        %v527 = vld [vmem:[#allocation5 + $0x4] sm:$0xf]
        %v528 = vld [vmem:[#allocation5 + $0x8] sm:$0xf]
        %v529 = vld [vmem:[#allocation5 + $0xc] sm:$0xf]
        %v530 = vld [vmem:[%s2] sm:$0x1]
        %v532 = vlaneseq
        %v533 = vshrl.u32 %v532, 7
        %v534 = vsub.s32 0, %v533
        %v535 = vrot.slane %v530, %v534
        %v541 = vunpack.c.l.b16 %v526
        %v542 = vunpack.c.l.b16 %v527
        %v543 = vunpack.c.l.b16 %v528
        %v544 = vunpack.c.l.b16 %v529
        %v545 = vpack.c.b16 %v542, %v541
        %v546 = vpack.c.b16 %v544, %v543
        %vm549 = vcmask 261120
        %v551 = vsel %vm549, %v525, 0
        %553 = vmatprep.subr.bf16.mxu0 0
        %554 = vmatpush1.bf16.msra.mxu0 %v545
        %555 = vmatprep.subr.bf16.mxu0 0
        %556 = vmatpush1.bf16.msra.mxu0 %v546
        %557 = vmatprep.subr.bf16.mxu0 0
        %558 = vmatpush1.bf16.msra.mxu0 0
        %559 = vmatprep.subr.bf16.mxu0 0
        %560 = vmatpush1.bf16.msra.mxu0 0
        %561 = vmatprep.subr.bf16.mxu0 0
        %562 = vmatpush1.bf16.msra.mxu0 0
        %563 = vmatprep.subr.bf16.mxu0 0
        %564 = vmatpush1.bf16.msra.mxu0 0
        %565 = vmatprep.subr.bf16.mxu0 0
        %566 = vmatpush1.bf16.msra.mxu0 0
        %567 = vmatprep.subr.bf16.mxu0 0
        %568 = vmatpush1.bf16.msra.mxu0 0
        %569 = vmatprep.subr.bf16.mxu0 0
        %570 = vmatpush1.bf16.msra.mxu0 0
        %571 = vmatprep.subr.bf16.mxu0 0
        %572 = vmatpush1.bf16.msra.mxu0 0
        %573 = vmatprep.subr.bf16.mxu0 0
        %574 = vmatpush1.bf16.msra.mxu0 0
        %575 = vmatprep.subr.bf16.mxu0 0
        %576 = vmatpush1.bf16.msra.mxu0 0
        %577 = vmatprep.subr.bf16.mxu0 0
        %578 = vmatpush1.bf16.msra.mxu0 0
        %579 = vmatprep.subr.bf16.mxu0 0
        %580 = vmatpush1.bf16.msra.mxu0 0
        %581 = vmatprep.subr.bf16.mxu0 0
        %582 = vmatpush1.bf16.msra.mxu0 0
        %583 = vmatprep.subr.bf16.mxu0 0
        %584 = vmatpush1.bf16.msra.mxu0 0
        %585 = vmatprep.mubr.bf16.mxu0 0
        %586 = vmatmul.mubr.bf16.gmra.mrb[0].mxu0 %v551
        %v587 = vpop.f32.mrb[0].mxu0
        %v588 = vadd.f32 %v535, %v587
        %v589 = vpop.f32.mrb[0].mxu0
        %v590 = vpop.f32.mrb[0].mxu0
        %v591 = vpop.f32.mrb[0].mxu0
        %592 = vdwg.mxu0
        %v593 = vpack.c.bf16 %v588, %v588
        %v595 = vrot.slane %v593, 6
        %596 = vrot.lane.b32.xlu0 %v595, 120
        %v597 = vpop.permute.xlu0 %596
        %v598 = vrot.slane %v593, 4
        %599 = vrot.lane.b32.xlu0 %v598, 112
        %v600 = vpop.permute.xlu0 %599
        %v601 = vrot.slane %v593, 2
        %602 = vrot.lane.b32.xlu0 %v601, 104
        %v603 = vpop.permute.xlu0 %602
        %vm604 = vcmask 1041408
        %v607 = vsel %vm604, %v593, %v597
        %vm608 = vcmask 1043456
        %v610 = vsel %vm608, %v607, %v600
        %vm611 = vcmask 1045504
        %v613 = vsel %vm611, %v610, %v603
        %614 = vrot.lane.b32.xlu0 %v595, 112
        %v615 = vpop.permute.xlu0 %614
        %v617 = vsel %vm604, %v593, %v615
        %618 = vrot.lane.b32.xlu0 %v593, 120
        %v619 = vpop.permute.xlu0 %618
        %620 = vrot.lane.b32.xlu0 %v598, 104
        %v621 = vpop.permute.xlu0 %620
        %v624 = vsel %vm604, %v601, %v619
        %v625 = vsel %vm608, %v624, %v615
        %v627 = vsel %vm611, %v625, %v621
        %628 = vrot.lane.b32.xlu0 %v593, 112
        %v629 = vpop.permute.xlu0 %628
        %v631 = vsel %vm604, %v601, %v629
        %633 = vrot.lane.b32.xlu0 %v613, 96
        %v634 = vpop.permute.xlu0 %633
        %vm636 = vcmask 130048
        %v637 = vsel %vm636, %v593, 0
        %639 = vmatprep.subr.bf16.mxu0 0
        %640 = vmatpush1.bf16.msra.mxu0 %v634
        %641 = vmatprep.subr.bf16.mxu0 0
        %642 = vmatpush1.bf16.msra.mxu0 0
        %643 = vmatprep.subr.bf16.mxu0 0
        %644 = vmatpush1.bf16.msra.mxu0 0
        %645 = vmatprep.subr.bf16.mxu0 0
        %646 = vmatpush1.bf16.msra.mxu0 0
        %647 = vmatprep.subr.bf16.mxu0 0
        %648 = vmatpush1.bf16.msra.mxu0 0
        %649 = vmatprep.subr.bf16.mxu0 0
        %650 = vmatpush1.bf16.msra.mxu0 0
        %651 = vmatprep.subr.bf16.mxu0 0
        %652 = vmatpush1.bf16.msra.mxu0 0
        %653 = vmatprep.subr.bf16.mxu0 0
        %654 = vmatpush1.bf16.msra.mxu0 0
        %655 = vmatprep.subr.bf16.mxu0 0
        %656 = vmatpush1.bf16.msra.mxu0 0
        %657 = vmatprep.subr.bf16.mxu0 0
        %658 = vmatpush1.bf16.msra.mxu0 0
        %659 = vmatprep.subr.bf16.mxu0 0
        %660 = vmatpush1.bf16.msra.mxu0 0
        %661 = vmatprep.subr.bf16.mxu0 0
        %662 = vmatpush1.bf16.msra.mxu0 0
        %663 = vmatprep.subr.bf16.mxu0 0
        %664 = vmatpush1.bf16.msra.mxu0 0
        %665 = vmatprep.subr.bf16.mxu0 0
        %666 = vmatpush1.bf16.msra.mxu0 0
        %667 = vmatprep.subr.bf16.mxu0 0
        %668 = vmatpush1.bf16.msra.mxu0 0
        %669 = vmatprep.subr.bf16.mxu0 0
        %670 = vmatpush1.bf16.msra.mxu0 0
        %671 = vmatprep.mubr.bf16.mxu0 0
        %672 = vmatmul.mubr.bf16.gmra.mrb[0].mxu0 %v637
        %v673 = vpop.f32.mrb[0].mxu0
        %v674 = vadd.f32 0.0, %v673
        %v675 = vpop.f32.mrb[0].mxu0
        %v676 = vpop.f32.mrb[0].mxu0
        %v677 = vpop.f32.mrb[0].mxu0
        %678 = vdwg.mxu0
        %680 = vrot.lane.b32.xlu0 %v627, 96
        %v681 = vpop.permute.xlu0 %680
        %v683 = vsel %vm636, %v601, 0
        %685 = vmatprep.subr.bf16.mxu0 0
        %686 = vmatpush1.bf16.msra.mxu0 %v681
        %687 = vmatprep.subr.bf16.mxu0 0
        %688 = vmatpush1.bf16.msra.mxu0 0
        %689 = vmatprep.subr.bf16.mxu0 0
        %690 = vmatpush1.bf16.msra.mxu0 0
        %691 = vmatprep.subr.bf16.mxu0 0
        %692 = vmatpush1.bf16.msra.mxu0 0
        %693 = vmatprep.subr.bf16.mxu0 0
        %694 = vmatpush1.bf16.msra.mxu0 0
        %695 = vmatprep.subr.bf16.mxu0 0
        %696 = vmatpush1.bf16.msra.mxu0 0
        %697 = vmatprep.subr.bf16.mxu0 0
        %698 = vmatpush1.bf16.msra.mxu0 0
        %699 = vmatprep.subr.bf16.mxu0 0
        %700 = vmatpush1.bf16.msra.mxu0 0
        %701 = vmatprep.subr.bf16.mxu0 0
        %702 = vmatpush1.bf16.msra.mxu0 0
        %703 = vmatprep.subr.bf16.mxu0 0
        %704 = vmatpush1.bf16.msra.mxu0 0
        %705 = vmatprep.subr.bf16.mxu0 0
        %706 = vmatpush1.bf16.msra.mxu0 0
        %707 = vmatprep.subr.bf16.mxu0 0
        %708 = vmatpush1.bf16.msra.mxu0 0
        %709 = vmatprep.subr.bf16.mxu0 0
        %710 = vmatpush1.bf16.msra.mxu0 0
        %711 = vmatprep.subr.bf16.mxu0 0
        %712 = vmatpush1.bf16.msra.mxu0 0
        %713 = vmatprep.subr.bf16.mxu0 0
        %714 = vmatpush1.bf16.msra.mxu0 0
        %715 = vmatprep.subr.bf16.mxu0 0
        %716 = vmatpush1.bf16.msra.mxu0 0
        %717 = vmatprep.mubr.bf16.mxu0 0
        %718 = vmatmul.mubr.bf16.gmra.mrb[0].mxu0 %v683
        %v719 = vpop.f32.mrb[0].mxu0
        %v720 = vadd.f32 0.0, %v719
        %v721 = vpop.f32.mrb[0].mxu0
        %v722 = vpop.f32.mrb[0].mxu0
        %v723 = vpop.f32.mrb[0].mxu0
        %724 = vdwg.mxu0
        %v725 = vmax.f32 %v674, %v720
        %v726 = vsub.f32 %v674, %v725
        %v727 = vmul.f32 %v726, 1.442695
        %v728 = vpow.pop %v727
        %v729 = vsub.f32 %v720, %v725
        %v730 = vmul.f32 %v729, 1.442695
        %v731 = vpow.pop %v730
        %v732 = vadd.f32 %v728, %v731
        %v733 = vrcp.pop %v732
        %v734 = vmul.f32 %v728, %v733
        %v735 = vpack.c.bf16 %v734, %v734
        %737 = vrot.lane.b32.xlu0 %v617, 64
        %v738 = vpop.permute.xlu0 %737
        %vm739 = vcmask 64512
        %v741 = vsel %vm739, %v735, 0
        %v744 = vsel %vm608, %v738, 0
        %746 = vmatprep.subr.bf16.mxu0 0
        %747 = vmatpush1.bf16.msra.mxu0 %v744
        %748 = vmatprep.subr.bf16.mxu0 0
        %749 = vmatpush1.bf16.msra.mxu0 0
        %750 = vmatprep.subr.bf16.mxu0 0
        %751 = vmatpush1.bf16.msra.mxu0 0
        %752 = vmatprep.subr.bf16.mxu0 0
        %753 = vmatpush1.bf16.msra.mxu0 0
        %754 = vmatprep.subr.bf16.mxu0 0
        %755 = vmatpush1.bf16.msra.mxu0 0
        %756 = vmatprep.subr.bf16.mxu0 0
        %757 = vmatpush1.bf16.msra.mxu0 0
        %758 = vmatprep.subr.bf16.mxu0 0
        %759 = vmatpush1.bf16.msra.mxu0 0
        %760 = vmatprep.subr.bf16.mxu0 0
        %761 = vmatpush1.bf16.msra.mxu0 0
        %762 = vmatprep.subr.bf16.mxu0 0
        %763 = vmatpush1.bf16.msra.mxu0 0
        %764 = vmatprep.subr.bf16.mxu0 0
        %765 = vmatpush1.bf16.msra.mxu0 0
        %766 = vmatprep.subr.bf16.mxu0 0
        %767 = vmatpush1.bf16.msra.mxu0 0
        %768 = vmatprep.subr.bf16.mxu0 0
        %769 = vmatpush1.bf16.msra.mxu0 0
        %770 = vmatprep.subr.bf16.mxu0 0
        %771 = vmatpush1.bf16.msra.mxu0 0
        %772 = vmatprep.subr.bf16.mxu0 0
        %773 = vmatpush1.bf16.msra.mxu0 0
        %774 = vmatprep.subr.bf16.mxu0 0
        %775 = vmatpush1.bf16.msra.mxu0 0
        %776 = vmatprep.subr.bf16.mxu0 0
        %777 = vmatpush1.bf16.msra.mxu0 0
        %778 = vmatprep.mubr.bf16.mxu0 0
        %779 = vmatmul.mubr.bf16.gmra.mrb[0].mxu0 %v741
        %v780 = vpop.f32.mrb[0].mxu0
        %v781 = vadd.f32 0.0, %v780
        %v782 = vpop.f32.mrb[0].mxu0
        %v783 = vpop.f32.mrb[0].mxu0
        %v784 = vpop.f32.mrb[0].mxu0
        %785 = vdwg.mxu0
        %v786 = vmul.f32 %v731, %v733
        %v787 = vpack.c.bf16 %v786, %v786
        %789 = vrot.lane.b32.xlu0 %v631, 64
        %v790 = vpop.permute.xlu0 %789
        %v792 = vsel %vm739, %v787, 0
        %v795 = vsel %vm608, %v790, 0
        %797 = vmatprep.subr.bf16.mxu0 0
        %798 = vmatpush1.bf16.msra.mxu0 %v795
        %799 = vmatprep.subr.bf16.mxu0 0
        %800 = vmatpush1.bf16.msra.mxu0 0
        %801 = vmatprep.subr.bf16.mxu0 0
        %802 = vmatpush1.bf16.msra.mxu0 0
        %803 = vmatprep.subr.bf16.mxu0 0
        %804 = vmatpush1.bf16.msra.mxu0 0
        %805 = vmatprep.subr.bf16.mxu0 0
        %806 = vmatpush1.bf16.msra.mxu0 0
        %807 = vmatprep.subr.bf16.mxu0 0
        %808 = vmatpush1.bf16.msra.mxu0 0
        %809 = vmatprep.subr.bf16.mxu0 0
        %810 = vmatpush1.bf16.msra.mxu0 0
        %811 = vmatprep.subr.bf16.mxu0 0
        %812 = vmatpush1.bf16.msra.mxu0 0
        %813 = vmatprep.subr.bf16.mxu0 0
        %814 = vmatpush1.bf16.msra.mxu0 0
        %815 = vmatprep.subr.bf16.mxu0 0
        %816 = vmatpush1.bf16.msra.mxu0 0
        %817 = vmatprep.subr.bf16.mxu0 0
        %818 = vmatpush1.bf16.msra.mxu0 0
        %819 = vmatprep.subr.bf16.mxu0 0
        %820 = vmatpush1.bf16.msra.mxu0 0
        %821 = vmatprep.subr.bf16.mxu0 0
        %822 = vmatpush1.bf16.msra.mxu0 0
        %823 = vmatprep.subr.bf16.mxu0 0
        %824 = vmatpush1.bf16.msra.mxu0 0
        %825 = vmatprep.subr.bf16.mxu0 0
        %826 = vmatpush1.bf16.msra.mxu0 0
        %827 = vmatprep.subr.bf16.mxu0 0
        %828 = vmatpush1.bf16.msra.mxu0 0
        %829 = vmatprep.mubr.bf16.mxu0 0
        %830 = vmatmul.mubr.bf16.gmra.mrb[0].mxu0 %v792
        %v831 = vpop.f32.mrb[0].mxu0
        %v832 = vadd.f32 0.0, %v831
        %v833 = vpop.f32.mrb[0].mxu0
        %v834 = vpop.f32.mrb[0].mxu0
        %v835 = vpop.f32.mrb[0].mxu0
        %836 = vdwg.mxu0
        %v837 = vsel %vm636, %v629, 0
        %839 = vmatprep.subr.bf16.mxu0 0
        %840 = vmatpush1.bf16.msra.mxu0 %v634
        %841 = vmatprep.subr.bf16.mxu0 0
        %842 = vmatpush1.bf16.msra.mxu0 0
        %843 = vmatprep.subr.bf16.mxu0 0
        %844 = vmatpush1.bf16.msra.mxu0 0
        %845 = vmatprep.subr.bf16.mxu0 0
        %846 = vmatpush1.bf16.msra.mxu0 0
        %847 = vmatprep.subr.bf16.mxu0 0
        %848 = vmatpush1.bf16.msra.mxu0 0
        %849 = vmatprep.subr.bf16.mxu0 0
        %850 = vmatpush1.bf16.msra.mxu0 0
        %851 = vmatprep.subr.bf16.mxu0 0
        %852 = vmatpush1.bf16.msra.mxu0 0
        %853 = vmatprep.subr.bf16.mxu0 0
        %854 = vmatpush1.bf16.msra.mxu0 0
        %855 = vmatprep.subr.bf16.mxu0 0
        %856 = vmatpush1.bf16.msra.mxu0 0
        %857 = vmatprep.subr.bf16.mxu0 0
        %858 = vmatpush1.bf16.msra.mxu0 0
        %859 = vmatprep.subr.bf16.mxu0 0
        %860 = vmatpush1.bf16.msra.mxu0 0
        %861 = vmatprep.subr.bf16.mxu0 0
        %862 = vmatpush1.bf16.msra.mxu0 0
        %863 = vmatprep.subr.bf16.mxu0 0
        %864 = vmatpush1.bf16.msra.mxu0 0
        %865 = vmatprep.subr.bf16.mxu0 0
        %866 = vmatpush1.bf16.msra.mxu0 0
        %867 = vmatprep.subr.bf16.mxu0 0
        %868 = vmatpush1.bf16.msra.mxu0 0
        %869 = vmatprep.subr.bf16.mxu0 0
        %870 = vmatpush1.bf16.msra.mxu0 0
        %871 = vmatprep.mubr.bf16.mxu0 0
        %872 = vmatmul.mubr.bf16.gmra.mrb[0].mxu0 %v837
        %v873 = vpop.f32.mrb[0].mxu0
        %v874 = vadd.f32 0.0, %v873
        %v875 = vpop.f32.mrb[0].mxu0
        %v876 = vpop.f32.mrb[0].mxu0
        %v877 = vpop.f32.mrb[0].mxu0
        %878 = vdwg.mxu0
        %879 = vrot.lane.b32.xlu0 %v601, 112
        %v880 = vpop.permute.xlu0 %879
        %v882 = vsel %vm636, %v880, 0
        %884 = vmatprep.subr.bf16.mxu0 0
        %885 = vmatpush1.bf16.msra.mxu0 %v681
        %886 = vmatprep.subr.bf16.mxu0 0
        %887 = vmatpush1.bf16.msra.mxu0 0
        %888 = vmatprep.subr.bf16.mxu0 0
        %889 = vmatpush1.bf16.msra.mxu0 0
        %890 = vmatprep.subr.bf16.mxu0 0
        %891 = vmatpush1.bf16.msra.mxu0 0
        %892 = vmatprep.subr.bf16.mxu0 0
        %893 = vmatpush1.bf16.msra.mxu0 0
        %894 = vmatprep.subr.bf16.mxu0 0
        %895 = vmatpush1.bf16.msra.mxu0 0
        %896 = vmatprep.subr.bf16.mxu0 0
        %897 = vmatpush1.bf16.msra.mxu0 0
        %898 = vmatprep.subr.bf16.mxu0 0
        %899 = vmatpush1.bf16.msra.mxu0 0
        %900 = vmatprep.subr.bf16.mxu0 0
        %901 = vmatpush1.bf16.msra.mxu0 0
        %902 = vmatprep.subr.bf16.mxu0 0
        %903 = vmatpush1.bf16.msra.mxu0 0
        %904 = vmatprep.subr.bf16.mxu0 0
        %905 = vmatpush1.bf16.msra.mxu0 0
        %906 = vmatprep.subr.bf16.mxu0 0
        %907 = vmatpush1.bf16.msra.mxu0 0
        %908 = vmatprep.subr.bf16.mxu0 0
        %909 = vmatpush1.bf16.msra.mxu0 0
        %910 = vmatprep.subr.bf16.mxu0 0
        %911 = vmatpush1.bf16.msra.mxu0 0
        %912 = vmatprep.subr.bf16.mxu0 0
        %913 = vmatpush1.bf16.msra.mxu0 0
        %914 = vmatprep.subr.bf16.mxu0 0
        %915 = vmatpush1.bf16.msra.mxu0 0
        %916 = vmatprep.mubr.bf16.mxu0 0
        %917 = vmatmul.mubr.bf16.gmra.mrb[0].mxu0 %v882
        %v918 = vpop.f32.mrb[0].mxu0
        %v919 = vadd.f32 0.0, %v918
        %v920 = vpop.f32.mrb[0].mxu0
        %v921 = vpop.f32.mrb[0].mxu0
        %v922 = vpop.f32.mrb[0].mxu0
        %923 = vdwg.mxu0
        %v924 = vmax.f32 %v874, %v919
        %v925 = vsub.f32 %v874, %v924
        %v926 = vmul.f32 %v925, 1.442695
        %v927 = vpow.pop %v926
        %v928 = vsub.f32 %v919, %v924
        %v929 = vmul.f32 %v928, 1.442695
        %v930 = vpow.pop %v929
        %v931 = vadd.f32 %v927, %v930
        %v932 = vrcp.pop %v931
        %v933 = vmul.f32 %v927, %v932
        %v934 = vpack.c.bf16 %v933, %v933
        %v936 = vsel %vm739, %v934, 0
        %938 = vmatprep.subr.bf16.mxu0 0
        %939 = vmatpush1.bf16.msra.mxu0 %v744
        %940 = vmatprep.subr.bf16.mxu0 0
        %941 = vmatpush1.bf16.msra.mxu0 0
        %942 = vmatprep.subr.bf16.mxu0 0
        %943 = vmatpush1.bf16.msra.mxu0 0
        %944 = vmatprep.subr.bf16.mxu0 0
        %945 = vmatpush1.bf16.msra.mxu0 0
        %946 = vmatprep.subr.bf16.mxu0 0
        %947 = vmatpush1.bf16.msra.mxu0 0
        %948 = vmatprep.subr.bf16.mxu0 0
        %949 = vmatpush1.bf16.msra.mxu0 0
        %950 = vmatprep.subr.bf16.mxu0 0
        %951 = vmatpush1.bf16.msra.mxu0 0
        %952 = vmatprep.subr.bf16.mxu0 0
        %953 = vmatpush1.bf16.msra.mxu0 0
        %954 = vmatprep.subr.bf16.mxu0 0
        %955 = vmatpush1.bf16.msra.mxu0 0
        %956 = vmatprep.subr.bf16.mxu0 0
        %957 = vmatpush1.bf16.msra.mxu0 0
        %958 = vmatprep.subr.bf16.mxu0 0
        %959 = vmatpush1.bf16.msra.mxu0 0
        %960 = vmatprep.subr.bf16.mxu0 0
        %961 = vmatpush1.bf16.msra.mxu0 0
        %962 = vmatprep.subr.bf16.mxu0 0
        %963 = vmatpush1.bf16.msra.mxu0 0
        %964 = vmatprep.subr.bf16.mxu0 0
        %965 = vmatpush1.bf16.msra.mxu0 0
        %966 = vmatprep.subr.bf16.mxu0 0
        %967 = vmatpush1.bf16.msra.mxu0 0
        %968 = vmatprep.subr.bf16.mxu0 0
        %969 = vmatpush1.bf16.msra.mxu0 0
        %970 = vmatprep.mubr.bf16.mxu0 0
        %971 = vmatmul.mubr.bf16.gmra.mrb[0].mxu0 %v936
        %v972 = vpop.f32.mrb[0].mxu0
        %v973 = vadd.f32 0.0, %v972
        %v974 = vpop.f32.mrb[0].mxu0
        %v975 = vpop.f32.mrb[0].mxu0
        %v976 = vpop.f32.mrb[0].mxu0
        %977 = vdwg.mxu0
        %v978 = vmul.f32 %v930, %v932
        %v979 = vpack.c.bf16 %v978, %v978
        %v981 = vsel %vm739, %v979, 0
        %983 = vmatprep.subr.bf16.mxu0 0
        %984 = vmatpush1.bf16.msra.mxu0 %v795
        %985 = vmatprep.subr.bf16.mxu0 0
        %986 = vmatpush1.bf16.msra.mxu0 0
        %987 = vmatprep.subr.bf16.mxu0 0
        %988 = vmatpush1.bf16.msra.mxu0 0
        %989 = vmatprep.subr.bf16.mxu0 0
        %990 = vmatpush1.bf16.msra.mxu0 0
        %991 = vmatprep.subr.bf16.mxu0 0
        %992 = vmatpush1.bf16.msra.mxu0 0
        %993 = vmatprep.subr.bf16.mxu0 0
        %994 = vmatpush1.bf16.msra.mxu0 0
        %995 = vmatprep.subr.bf16.mxu0 0
        %996 = vmatpush1.bf16.msra.mxu0 0
        %997 = vmatprep.subr.bf16.mxu0 0
        %998 = vmatpush1.bf16.msra.mxu0 0
        %999 = vmatprep.subr.bf16.mxu0 0
        %1000 = vmatpush1.bf16.msra.mxu0 0
        %1001 = vmatprep.subr.bf16.mxu0 0
        %1002 = vmatpush1.bf16.msra.mxu0 0
        %1003 = vmatprep.subr.bf16.mxu0 0
        %1004 = vmatpush1.bf16.msra.mxu0 0
        %1005 = vmatprep.subr.bf16.mxu0 0
        %1006 = vmatpush1.bf16.msra.mxu0 0
        %1007 = vmatprep.subr.bf16.mxu0 0
        %1008 = vmatpush1.bf16.msra.mxu0 0
        %1009 = vmatprep.subr.bf16.mxu0 0
        %1010 = vmatpush1.bf16.msra.mxu0 0
        %1011 = vmatprep.subr.bf16.mxu0 0
        %1012 = vmatpush1.bf16.msra.mxu0 0
        %1013 = vmatprep.subr.bf16.mxu0 0
        %1014 = vmatpush1.bf16.msra.mxu0 0
        %1015 = vmatprep.mubr.bf16.mxu0 0
        %1016 = vmatmul.mubr.bf16.gmra.mrb[0].mxu0 %v981
        %v1017 = vpop.f32.mrb[0].mxu0
        %v1018 = vadd.f32 0.0, %v1017
        %v1019 = vpop.f32.mrb[0].mxu0
        %v1020 = vpop.f32.mrb[0].mxu0
        %v1021 = vpop.f32.mrb[0].mxu0
        %1022 = vdwg.mxu0
        %1024 = vrot.lane.b32.xlu0 %v973, 16
        %v1025 = vpop.permute.xlu0 %1024
        %v1027 = vsel %vm636, %v781, %v1025
        %1029 = vrot.lane.b32.xlu0 %v1018, 16
        %v1030 = vpop.permute.xlu0 %1029
        %v1032 = vsel %vm636, %v832, %v1030
        %v1034 = vrot.slane %v1032, 4
        %v1036 = vsel %vm608, %v1027, %v1034
        %v1037 = vpack.c.bf16 %v1036, %v1036
        %v1038 = vld [vmem:[#allocation7] sm:$0xf]
        %v1039 = vld [vmem:[#allocation7 + $0x4] sm:$0xf]
        %v1040 = vld [vmem:[#allocation7 + $0x8] sm:$0xf]
        %v1041 = vld [vmem:[#allocation7 + $0xc] sm:$0xf]
        %v1042 = vld [vmem:[%s4] sm:$0x1]
        %v1044 = vlaneseq
        %v1045 = vshrl.u32 %v1044, 7
        %v1046 = vsub.s32 0, %v1045
        %v1047 = vrot.slane %v1042, %v1046
        %v1053 = vunpack.c.l.b16 %v1038
        %v1054 = vunpack.c.l.b16 %v1039
        %v1055 = vunpack.c.l.b16 %v1040
        %v1056 = vunpack.c.l.b16 %v1041
        %v1057 = vpack.c.b16 %v1054, %v1053
        %v1058 = vpack.c.b16 %v1056, %v1055
        %v1062 = vsel %vm549, %v1037, 0
        %1064 = vmatprep.subr.bf16.mxu0 0
        %1065 = vmatpush1.bf16.msra.mxu0 %v1057
        %1066 = vmatprep.subr.bf16.mxu0 0
        %1067 = vmatpush1.bf16.msra.mxu0 %v1058
        %1068 = vmatprep.subr.bf16.mxu0 0
        %1069 = vmatpush1.bf16.msra.mxu0 0
        %1070 = vmatprep.subr.bf16.mxu0 0
        %1071 = vmatpush1.bf16.msra.mxu0 0
        %1072 = vmatprep.subr.bf16.mxu0 0
        %1073 = vmatpush1.bf16.msra.mxu0 0
        %1074 = vmatprep.subr.bf16.mxu0 0
        %1075 = vmatpush1.bf16.msra.mxu0 0
        %1076 = vmatprep.subr.bf16.mxu0 0
        %1077 = vmatpush1.bf16.msra.mxu0 0
        %1078 = vmatprep.subr.bf16.mxu0 0
        %1079 = vmatpush1.bf16.msra.mxu0 0
        %1080 = vmatprep.subr.bf16.mxu0 0
        %1081 = vmatpush1.bf16.msra.mxu0 0
        %1082 = vmatprep.subr.bf16.mxu0 0
        %1083 = vmatpush1.bf16.msra.mxu0 0
        %1084 = vmatprep.subr.bf16.mxu0 0
        %1085 = vmatpush1.bf16.msra.mxu0 0
        %1086 = vmatprep.subr.bf16.mxu0 0
        %1087 = vmatpush1.bf16.msra.mxu0 0
        %1088 = vmatprep.subr.bf16.mxu0 0
        %1089 = vmatpush1.bf16.msra.mxu0 0
        %1090 = vmatprep.subr.bf16.mxu0 0
        %1091 = vmatpush1.bf16.msra.mxu0 0
        %1092 = vmatprep.subr.bf16.mxu0 0
        %1093 = vmatpush1.bf16.msra.mxu0 0
        %1094 = vmatprep.subr.bf16.mxu0 0
        %1095 = vmatpush1.bf16.msra.mxu0 0
        %1096 = vmatprep.mubr.bf16.mxu0 0
        %1097 = vmatmul.mubr.bf16.gmra.mrb[0].mxu0 %v1062
        %v1098 = vpop.f32.mrb[0].mxu0
        %v1099 = vadd.f32 %v1047, %v1098
        %v1100 = vpop.f32.mrb[0].mxu0
        %v1101 = vpop.f32.mrb[0].mxu0
        %v1102 = vpop.f32.mrb[0].mxu0
        %1103 = vdwg.mxu0
        %v1104 = vadd.f32 %v1099, %v524
        %v1105 = vsel %vm549, %v1104, 0.0
        %1106 = vadd.xlane.f32.xlu0 %v1105
        %v1107 = vpop.xlane.xlu0 %1106
        %v1108 = vrcp.pop 32.0
        %v1109 = vmul.f32 %v1107, %v1108
        %v1110 = vsub.f32 %v1104, %v1109
        %v1111 = vmul.f32 %v1110, %v1110
        %v1112 = vsel %vm549, %v1111, 0.0
        %1113 = vadd.xlane.f32.xlu0 %v1112
        %v1114 = vpop.xlane.xlu0 %1113
        %v1115 = vmul.f32 %v1114, %v1108
        %v1116 = vadd.f32 %v1115, 1e-05
        %v1117 = vrsqrt.pop %v1116
        %v1118 = vmul.f32 %v1110, %v1117
        %v1119 = vld [vmem:[#allocation8] sm:$0x1]
        %v1121 = vlaneseq
        %v1122 = vshrl.u32 %v1121, 7
        %v1123 = vsub.s32 0, %v1122
        %v1124 = vrot.slane %v1119, %v1123
        %v1126 = vmul.f32 %v1118, %v1124
        %v1127 = vld [vmem:[#allocation10] sm:$0x1]
        %v1129 = vlaneseq
        %v1130 = vshrl.u32 %v1129, 7
        %v1131 = vsub.s32 0, %v1130
        %v1132 = vrot.slane %v1127, %v1131
        %v1134 = vadd.f32 %v1126, %v1132
        %v1135 = vpack.c.bf16 %v1134, %v1134
        %v1136 = vld [vmem:[%s7] sm:$0xf]
        %v1137 = vld [vmem:[%s7 + $0x4] sm:$0xf]
        %v1138 = vld [vmem:[%s7 + $0x8] sm:$0xf]
        %v1139 = vld [vmem:[%s7 + $0xc] sm:$0xf]
        %v1140 = vld [vmem:[#allocation11] sm:$0x1]
        %v1142 = vlaneseq
        %v1143 = vshrl.u32 %v1142, 7
        %v1144 = vsub.s32 0, %v1143
        %v1145 = vrot.slane %v1140, %v1144
        %v1151 = vunpack.c.l.b16 %v1136
        %v1152 = vunpack.c.l.b16 %v1137
        %v1153 = vunpack.c.l.b16 %v1138
        %v1154 = vunpack.c.l.b16 %v1139
        %v1155 = vpack.c.b16 %v1152, %v1151
        %v1156 = vpack.c.b16 %v1154, %v1153
        %v1160 = vsel %vm549, %v1135, 0
        %1162 = vmatprep.subr.bf16.mxu0 0
        %1163 = vmatpush1.bf16.msra.mxu0 %v1155
        %1164 = vmatprep.subr.bf16.mxu0 0
        %1165 = vmatpush1.bf16.msra.mxu0 %v1156
        %1166 = vmatprep.subr.bf16.mxu0 0
        %1167 = vmatpush1.bf16.msra.mxu0 0
        %1168 = vmatprep.subr.bf16.mxu0 0
        %1169 = vmatpush1.bf16.msra.mxu0 0
        %1170 = vmatprep.subr.bf16.mxu0 0
        %1171 = vmatpush1.bf16.msra.mxu0 0
        %1172 = vmatprep.subr.bf16.mxu0 0
        %1173 = vmatpush1.bf16.msra.mxu0 0
        %1174 = vmatprep.subr.bf16.mxu0 0
        %1175 = vmatpush1.bf16.msra.mxu0 0
        %1176 = vmatprep.subr.bf16.mxu0 0
        %1177 = vmatpush1.bf16.msra.mxu0 0
        %1178 = vmatprep.subr.bf16.mxu0 0
        %1179 = vmatpush1.bf16.msra.mxu0 0
        %1180 = vmatprep.subr.bf16.mxu0 0
        %1181 = vmatpush1.bf16.msra.mxu0 0
        %1182 = vmatprep.subr.bf16.mxu0 0
        %1183 = vmatpush1.bf16.msra.mxu0 0
        %1184 = vmatprep.subr.bf16.mxu0 0
        %1185 = vmatpush1.bf16.msra.mxu0 0
        %1186 = vmatprep.subr.bf16.mxu0 0
        %1187 = vmatpush1.bf16.msra.mxu0 0
        %1188 = vmatprep.subr.bf16.mxu0 0
        %1189 = vmatpush1.bf16.msra.mxu0 0
        %1190 = vmatprep.subr.bf16.mxu0 0
        %1191 = vmatpush1.bf16.msra.mxu0 0
        %1192 = vmatprep.subr.bf16.mxu0 0
        %1193 = vmatpush1.bf16.msra.mxu0 0
        %1194 = vmatprep.mubr.bf16.mxu0 0
        %1195 = vmatmul.mubr.bf16.gmra.mrb[0].mxu0 %v1160
        %v1196 = vpop.f32.mrb[0].mxu0
        %v1197 = vadd.f32 %v1145, %v1196
        %v1198 = vpop.f32.mrb[0].mxu0
        %v1199 = vpop.f32.mrb[0].mxu0
        %v1200 = vpop.f32.mrb[0].mxu0
        %1201 = vdwg.mxu0
        %v1202 = vmax.f32 %v1197, 0.0
        %v1203 = vpack.c.bf16 %v1202, %v1202
        %v1204 = vld [vmem:[%s9] sm:$0xf]
        %v1205 = vld [vmem:[%s9 + $0x4] sm:$0xf]
        %v1206 = vld [vmem:[%s9 + $0x8] sm:$0xf]
        %v1207 = vld [vmem:[%s9 + $0xc] sm:$0xf]
        %v1208 = vld [vmem:[%s10] sm:$0x1]
        %v1210 = vlaneseq
        %v1211 = vshrl.u32 %v1210, 7
        %v1212 = vsub.s32 0, %v1211
        %v1213 = vrot.slane %v1208, %v1212
        %v1219 = vunpack.c.l.b16 %v1204
        %v1220 = vunpack.c.l.b16 %v1205
        %v1221 = vunpack.c.l.b16 %v1206
        %v1222 = vunpack.c.l.b16 %v1207
        %v1223 = vpack.c.b16 %v1220, %v1219
        %v1224 = vpack.c.b16 %v1222, %v1221
        %v1228 = vsel %vm549, %v1203, 0
        %1230 = vmatprep.subr.bf16.mxu0 0
        %1231 = vmatpush1.bf16.msra.mxu0 %v1223
        %1232 = vmatprep.subr.bf16.mxu0 0
        %1233 = vmatpush1.bf16.msra.mxu0 %v1224
        %1234 = vmatprep.subr.bf16.mxu0 0
        %1235 = vmatpush1.bf16.msra.mxu0 0
        %1236 = vmatprep.subr.bf16.mxu0 0
        %1237 = vmatpush1.bf16.msra.mxu0 0
        %1238 = vmatprep.subr.bf16.mxu0 0
        %1239 = vmatpush1.bf16.msra.mxu0 0
        %1240 = vmatprep.subr.bf16.mxu0 0
        %1241 = vmatpush1.bf16.msra.mxu0 0
        %1242 = vmatprep.subr.bf16.mxu0 0
        %1243 = vmatpush1.bf16.msra.mxu0 0
        %1244 = vmatprep.subr.bf16.mxu0 0
        %1245 = vmatpush1.bf16.msra.mxu0 0
        %1246 = vmatprep.subr.bf16.mxu0 0
        %1247 = vmatpush1.bf16.msra.mxu0 0
        %1248 = vmatprep.subr.bf16.mxu0 0
        %1249 = vmatpush1.bf16.msra.mxu0 0
        %1250 = vmatprep.subr.bf16.mxu0 0
        %1251 = vmatpush1.bf16.msra.mxu0 0
        %1252 = vmatprep.subr.bf16.mxu0 0
        %1253 = vmatpush1.bf16.msra.mxu0 0
        %1254 = vmatprep.subr.bf16.mxu0 0
        %1255 = vmatpush1.bf16.msra.mxu0 0
        %1256 = vmatprep.subr.bf16.mxu0 0
        %1257 = vmatpush1.bf16.msra.mxu0 0
        %1258 = vmatprep.subr.bf16.mxu0 0
        %1259 = vmatpush1.bf16.msra.mxu0 0
        %1260 = vmatprep.subr.bf16.mxu0 0
        %1261 = vmatpush1.bf16.msra.mxu0 0
        %1262 = vmatprep.mubr.bf16.mxu0 0
        %1263 = vmatmul.mubr.bf16.gmra.mrb[0].mxu0 %v1228
        %v1264 = vpop.f32.mrb[0].mxu0
        %v1265 = vadd.f32 %v1213, %v1264
        %v1266 = vpop.f32.mrb[0].mxu0
        %v1267 = vpop.f32.mrb[0].mxu0
        %v1268 = vpop.f32.mrb[0].mxu0
        %1269 = vdwg.mxu0
        %v1270 = vadd.f32 %v1265, %v1134
        %v1271 = vsel %vm549, %v1270, 0.0
        %1272 = vadd.xlane.f32.xlu0 %v1271
        %v1273 = vpop.xlane.xlu0 %1272
        %v1274 = vmul.f32 %v1273, %v1108
        %v1275 = vsub.f32 %v1270, %v1274
        %v1276 = vmul.f32 %v1275, %v1275
        %v1277 = vsel %vm549, %v1276, 0.0
        %1278 = vadd.xlane.f32.xlu0 %v1277
        %v1279 = vpop.xlane.xlu0 %1278
        %v1280 = vmul.f32 %v1279, %v1108
        %v1281 = vadd.f32 %v1280, 1e-05
        %v1282 = vrsqrt.pop %v1281
        %v1283 = vmul.f32 %v1275, %v1282
        %v1284 = vld [vmem:[%s11] sm:$0x1]
        %v1286 = vlaneseq
        %v1287 = vshrl.u32 %v1286, 7
        %v1288 = vsub.s32 0, %v1287
        %v1289 = vrot.slane %v1284, %v1288
        %v1291 = vmul.f32 %v1283, %v1289
        %v1292 = vld [vmem:[%s12] sm:$0x1]
        %v1294 = vlaneseq
        %v1295 = vshrl.u32 %v1294, 7
        %v1296 = vsub.s32 0, %v1295
        %v1297 = vrot.slane %v1292, %v1296
        %v1299 = vadd.f32 %v1291, %v1297
        %1300 = vst.msk [vmem:[%s522] sm:$0xff] %vm549, %v1299
        %s1301 = sand.u32 %s319, 1
        %s1302 = scalar_lea.sflag [#allocation4], %s1301
        %s1303 = sand.u32 %s319, 1
        %s1304 = smul.addr %s1303, 8
        %s1305 = scalar_lea.vmem [#allocation13], %s1304
        // Predicated region
        $region97: #{tpu_custom_call.1} parent=71 // pred_check
          %p1306 = pneg %p329
        $region98: #{tpu_custom_call.1} parent=71 // pred_check_branch
          %1308 = sbr.rel (%p1306) target = $region100
        $region99: #{tpu_custom_call.1} parent=71 // pred_region
          %s1310 = ssub.s32 128, 128
          %1311 = vsyncadd %s1302, %s1310
          %s1312 = smul.addr %s33, 128
          %s1313 = scalar_lea.hbm %s13, %s1312
          %s1315 = sshll.u32 %s1305, 4
          %s1316 = int_to_ptr.vmem [resolvable:$true] %s1315
          %1318 = dma.vmem_to_hbm [thread:$0]  %s1316, 128, %s1313, %s1302
        $region100: #{tpu_custom_call.1} parent=71 // pred_fallthru
          _
      $region72: #{tpu_custom_call.1} parent=5 // pred_fallthru
        _
      %p1319 = scmp.le.s32.totalorder 2, %s28
      // Predicated region
      $region101: #{tpu_custom_call.1} parent=5 // pred_check
        %p1320 = pneg %p1319
      $region102: #{tpu_custom_call.1} parent=5 // pred_check_branch
        %1322 = sbr.rel (%p1320) target = $region104
      $region103: #{tpu_custom_call.1} parent=5 // pred_region
        %s1323 = ssub.s32 %s28, 2
        // Predicated region
        $region105: #{tpu_custom_call.1} parent=103 // pred_check
          %p1324 = pneg %p335
        $region106: #{tpu_custom_call.1} parent=103 // pred_check_branch
          %1326 = sbr.rel (%p1324) target = $region108
        $region107: #{tpu_custom_call.1} parent=103 // pred_region
          %s1327 = sand.u32 %s320, 1
          %s1328 = scalar_lea.sflag [#allocation4], %s1327
          %s1329 = sand.u32 %s320, 1
          %s1330 = smul.addr %s1329, 8
          %s1331 = scalar_lea.vmem [#allocation13], %s1330
          %1332 = dma.done %s1328, 128
        $region108: #{tpu_custom_call.1} parent=103 // pred_fallthru
          _
      $region104: #{tpu_custom_call.1} parent=5 // pred_fallthru
        _
    $region6: #{tpu_custom_call.1} parent=1 // loop_footer
      %s32 = sadd.s32 1, %s28
    $region7: #{tpu_custom_call.1} parent=1 // loop_footer_branch
      %27 = sbr.rel target = $region3
    $region8: #{tpu_custom_call.1} parent=1 // loop_exit
      _
    %1333 = vsyncpa [#allocation3], 1
    %s1334 = scalar_lea.sflag [#allocation3], 1
    %1335 = vsyncpa %s1334, 1
    %1336 = vsyncpa [#allocation6], 1
    %1337 = vsyncpa [#allocation9], 1
    %1338 = vsyncpa [#allocation12], 1
    %1339 = vsyncpa [#allocation4], 1
    %s1340 = scalar_lea.sflag [#allocation4], 1
    %1341 = vsyncpa %s1340, 1

</llo_original>
